<compile_context>
chip_gen: v6e
topology: v6e:2x2x1
jax: 0.10.0
libtpu: 0.0.40
codegen_flags: <defaults>
</compile_context>

<pallas_src>
import jax
import jax.numpy as jnp
from jax import lax
from jax.experimental import pallas as pl
from jax.experimental.pallas import tpu as pltpu

EPS = 1e-5
_LANES = 128
_VMEM_LIMIT = 32 * 1024 * 1024   # <= 50% of v7x's 64 MiB physical VMEM


def _conv3x3_banded(act, wb_ref):
    """3x3 'SAME' conv on one image slab.

    act   : (H, WCp) f32, lane = w*C + c (pad lanes are zero).
    wb_ref: (3, WCp, WCp) bf16 banded block-Toeplitz weights; each band folds
            the kw taps, the Cin contraction and the W-direction zero padding.
    The kh = 0 / 2 taps come from sublane rolls (XLU slot) masked at the image
    boundary -- no sliced/concatenated activation copies, one MXU matmul per
    band accumulated in f32.
    """
    H, WCp = act.shape
    h_idx = lax.broadcasted_iota(jnp.int32, (H, WCp), 0)
    above = jnp.where(h_idx == 0, 0.0, pltpu.roll(act, 1, 0))        # row h-1
    below = jnp.where(h_idx == H - 1, 0.0, pltpu.roll(act, H - 1, 0))  # row h+1
    acc = jnp.dot(above.astype(jnp.bfloat16), wb_ref[0],
                  preferred_element_type=jnp.float32)
    acc += jnp.dot(act.astype(jnp.bfloat16), wb_ref[1],
                   preferred_element_type=jnp.float32)
    acc += jnp.dot(below.astype(jnp.bfloat16), wb_ref[2],
                   preferred_element_type=jnp.float32)
    return acc


def _row_stats(y):
    # Per-lane sum / sum-of-squares over the image rows (f32).
    return jnp.concatenate([jnp.sum(y, axis=0, keepdims=True),
                            jnp.sum(y * y, axis=0, keepdims=True)], axis=0)


def _conv_stats_kernel(x_ref, wb_ref, y_ref, stats_ref):
    """Phase 1: y1 = conv1(x); accumulate per-lane BN1 statistics."""
    @pl.when(pl.program_id(0) == 0)
    def _init():
        stats_ref[...] = jnp.zeros_like(stats_ref)

    y = _conv3x3_banded(x_ref[0], wb_ref)
    y_ref[0] = y
    stats_ref[...] += _row_stats(y)


def _bn_relu_conv_stats_kernel(y1_ref, s1_ref, wb_ref, y2_ref, stats_ref):
    """Phase 2: a1 = relu(bn1(y1)); y2 = conv2(a1); accumulate BN2 stats."""
    @pl.when(pl.program_id(0) == 0)
    def _init():
        stats_ref[...] = jnp.zeros_like(stats_ref)

    a1 = jnp.maximum(y1_ref[0] * s1_ref[0:1, :] + s1_ref[1:2, :], 0.0)
    y = _conv3x3_banded(a1, wb_ref)
    y2_ref[0] = y
    stats_ref[...] += _row_stats(y)


def _bn_add_relu_kernel(y2_ref, x_ref, s2_ref, out_ref):
    """Phase 3: out = relu(bn2(y2) + residual)."""
    out_ref[0] = jnp.maximum(
        y2_ref[0] * s2_ref[0:1, :] + s2_ref[1:2, :] + x_ref[0], 0.0)


def _band_weights(w_hwio, W, WCp):
    """(3, 3, Cin, Cout) HWIO weight -> (3, WCp, WCp) bf16 banded weights.

    Band kh has block (w_in, w_out) equal to w[kh, kw] when w_in - w_out ==
    kw - 1 and zero otherwise, so `rows @ band` applies all kw taps and the Cin
    contraction of one kh tap in a single matmul with the W-direction "SAME"
    zero padding folded in.  Padded rows/cols (to 128 lanes) are zero.
    """
    C = w_hwio.shape[-1]
    WC = W * C
    bands = []
    for kh in range(3):
        band = sum(jnp.kron(jnp.eye(W, W, k=1 - kw, dtype=jnp.float32),
                            w_hwio[kh, kw].astype(jnp.float32))
                   for kw in range(3))
        bands.append(jnp.pad(band, ((0, WCp - WC), (0, WCp - WC))))
    return jnp.stack(bands, axis=0).astype(jnp.bfloat16)


def _bn_scale_shift_lanes(stats_l, gamma, beta, N, H, W, C, WCp):
    """Per-lane (sum, sumsq) -> lane-broadcast (2, WCp) f32 [scale; shift].

    Training-mode BN: batch mean / biased variance over (N, H, W).  This is
    O(C) work on device between pallas_calls (8 floats here).
    """
    WC = W * C
    s_c = stats_l[:, :WC].reshape(2, W, C).sum(axis=1)            # (2, C)
    inv_count = 1.0 / (N * H * W)
    mean = s_c[0] * inv_count
    var = s_c[1] * inv_count - mean * mean                        # biased var
    scale = gamma.astype(jnp.float32) * lax.rsqrt(var + EPS)
    shift = beta.astype(jnp.float32) - mean * scale
    pad = WCp - WC                                                # pad lanes stay 0
    return jnp.stack([jnp.pad(jnp.tile(scale, W), (0, pad)),
                      jnp.pad(jnp.tile(shift, W), (0, pad))], axis=0)


@jax.jit
def residual_block(x_nchw, w1, b1, g1, be1, w2, b2, g2, be2):
    """PyTorch ResidualBlock.forward (training-mode BN). x_nchw: (N,C,H,W) f32.

    b1/b2 are accepted for nn.Conv2d parity but never reach the kernels:
    training-mode BatchNorm subtracts the batch mean, which exactly cancels a
    per-channel conv bias.  (If switched to eval-mode BN with running stats,
    the biases must be reinstated.)
    """
    del b1, b2
    N, C, H, W = x_nchw.shape
    WC = W * C
    # Banded conv is O((W*C)^2) weight and ~W/3 FLOP inflation: only use it for
    # small W*C.  TODO(synk): padded-C im2col path for realistic shapes.
    assert WC <= 512, "banded conv path is bounded to W*C <= 512"
    WCp = ((WC + _LANES - 1) // _LANES) * _LANES   # lane-dense, 128-aligned

    # NCHW -> lane-dense (N, H, W*C) slabs, zero-padded to 128 lanes.
    # TODO(synk): at realistic sizes keep the surrounding model NHWC so this
    #             relayout (an extra HBM round trip) disappears.
    x3 = jnp.transpose(x_nchw, (0, 2, 3, 1)).astype(jnp.float32).reshape(N, H, WC)
    x_p = jnp.pad(x3, ((0, 0), (0, 0), (0, WCp - WC)))

    wb1 = _band_weights(w1, W, WCp)                 # (3, WCp, WCp) bf16
    wb2 = _band_weights(w2, W, WCp)

    img_spec = pl.BlockSpec((1, H, WCp), lambda n: (n, 0, 0))
    wb_spec = pl.BlockSpec((3, WCp, WCp), lambda n: (0, 0, 0))
    ss_spec = pl.BlockSpec((2, WCp), lambda n: (0, 0))
    img_shape = jax.ShapeDtypeStruct((N, H, WCp), jnp.float32)
    ss_shape = jax.ShapeDtypeStruct((2, WCp), jnp.float32)

    conv_flops = 2 * 3 * N * H * WCp * WCp
    img_bytes = 4 * N * H * WCp
    wb_bytes = 2 * 3 * WCp * WCp

    # ---- Phase 1: conv1 + BN1 statistics.  Batch axis carries the stats
    #      accumulator (resident output block) -> "arbitrary".
    y1, stats1 = pl.pallas_call(
        _conv_stats_kernel,
        out_shape=(img_shape, ss_shape),
        grid_spec=pltpu.PrefetchScalarGridSpec(
            num_scalar_prefetch=0, grid=(N,),
            in_specs=[img_spec, wb_spec],
            out_specs=[img_spec, ss_spec]),
        compiler_params=pltpu.CompilerParams(
            dimension_semantics=("arbitrary",),
            vmem_limit_bytes=_VMEM_LIMIT),
        cost_estimate=pl.CostEstimate(
            flops=conv_flops, transcendentals=0,
            bytes_accessed=2 * img_bytes + wb_bytes + 8 * WCp),
    )(x_p, wb1)

    s1 = _bn_scale_shift_lanes(stats1, g1, be1, N, H, W, C, WCp)

    # ---- Phase 2: BN1-apply + ReLU + conv2 + BN2 statistics.
    y2, stats2 = pl.pallas_call(
        _bn_relu_conv_stats_kernel,
        out_shape=(img_shape, ss_shape),
        grid_spec=pltpu.PrefetchScalarGridSpec(
            num_scalar_prefetch=0, grid=(N,),
            in_specs=[img_spec, ss_spec, wb_spec],
            out_specs=[img_spec, ss_spec]),
        compiler_params=pltpu.CompilerParams(
            dimension_semantics=("arbitrary",),
            vmem_limit_bytes=_VMEM_LIMIT),
        cost_estimate=pl.CostEstimate(
            flops=conv_flops + 3 * N * H * WCp, transcendentals=0,
            bytes_accessed=2 * img_bytes + wb_bytes + 16 * WCp),
    )(y1, s1, wb2)

    s2 = _bn_scale_shift_lanes(stats2, g2, be2, N, H, W, C, WCp)

    # ---- Phase 3: BN2-apply + residual add + ReLU.  Purely per-image
    #      elementwise -> "parallel" (shards across v7x's 2 TensorCores).
    out_p = pl.pallas_call(
        _bn_add_relu_kernel,
        out_shape=img_shape,
        grid_spec=pltpu.PrefetchScalarGridSpec(
            num_scalar_prefetch=0, grid=(N,),
            in_specs=[img_spec, img_spec, ss_spec],
            out_specs=img_spec),
        compiler_params=pltpu.CompilerParams(
            dimension_semantics=("parallel",),
            vmem_limit_bytes=_VMEM_LIMIT),
        cost_estimate=pl.CostEstimate(
            flops=4 * N * H * WCp, transcendentals=0,
            bytes_accessed=3 * img_bytes + 8 * WCp),
    )(y2, x_p, s2)

    out = out_p[:, :, :WC].reshape(N, H, W, C)
    return jnp.transpose(out, (0, 3, 1, 2))


def _reference(x_nchw, w1, b1, g1, be1, w2, b2, g2, be2):
    """Pure-JAX f32 reference (no Pallas) for verification."""
    x = jnp.transpose(x_nchw, (0, 2, 3, 1))
    dn = ('NHWC', 'HWIO', 'NHWC')

    def conv(y, w, b):
        return lax.conv_general_dilated(y, w, (1, 1), 'SAME',
                                        dimension_numbers=dn) + b

    def bn(y, g, be):
        m = jnp.mean(y, axis=(0, 1, 2), keepdims=True)
        v = jnp.mean((y - m) ** 2, axis=(0, 1, 2), keepdims=True)
        return (y - m) * lax.rsqrt(v + EPS) * g + be

    out = jax.nn.relu(bn(conv(x, w1, b1), g1, be1))
    out = bn(conv(out, w2, b2), g2, be2)
    out = jax.nn.relu(out + x)
    return jnp.transpose(out, (0, 3, 1, 2))


if __name__ == "__main__":
    N, C, H, W = 2, 4, 16, 16
    key = jax.random.PRNGKey(0)
    kx, kw1, kb1, kw2, kb2, kg1, kbe1, kg2, kbe2 = jax.random.split(key, 9)

    x = jax.random.normal(kx, (N, C, H, W), jnp.float32)

    # Conv weights stored as (kh, kw, Cin, Cout); deterministic init.
    fan_in = C * 3 * 3
    bound = 1.0 / jnp.sqrt(fan_in)
    w1 = jax.random.uniform(kw1, (3, 3, C, C), jnp.float32, -bound, bound)
    b1 = jax.random.uniform(kb1, (C,), jnp.float32, -bound, bound)
    w2 = jax.random.uniform(kw2, (3, 3, C, C), jnp.float32, -bound, bound)
    b2 = jax.random.uniform(kb2, (C,), jnp.float32, -bound, bound)
    # BatchNorm affine params (non-trivial values to exercise the affine path).
    g1 = 1.0 + 0.1 * jax.random.normal(kg1, (C,), jnp.float32)
    be1 = 0.1 * jax.random.normal(kbe1, (C,), jnp.float32)
    g2 = 1.0 + 0.1 * jax.random.normal(kg2, (C,), jnp.float32)
    be2 = 0.1 * jax.random.normal(kbe2, (C,), jnp.float32)

    out = residual_block(x, w1, b1, g1, be1, w2, b2, g2, be2)
    out = jax.block_until_ready(out)

    ref = _reference(x, w1, b1, g1, be1, w2, b2, g2, be2)
    assert out.shape == (N, C, H, W)
    # Tolerance reflects bf16 MXU operands (f32 accumulation / f32 BN math);
    # the f32 reference is exact.
    assert jnp.allclose(out, ref, atol=5e-2, rtol=5e-2), \
        f"max abs err {jnp.max(jnp.abs(out - ref))}"

    print("KERNEL_OK")
</pallas_src>

<mosaic_0001>
module attributes {stable_mosaic.version = 11 : i64} {
  func.func @_conv_stats_kernel(%arg0: i32, %arg1: memref<1x16x128xf32, #tpu.memory_space<vmem>>, %arg2: memref<3x128x128xbf16, #tpu.memory_space<vmem>>, %arg3: memref<1x16x128xf32, #tpu.memory_space<vmem>>, %arg4: memref<2x128xf32, #tpu.memory_space<vmem>>) attributes {dimension_semantics = [#tpu.dimension_semantics<arbitrary>], iteration_bounds = array<i64: 2>, scalar_prefetch = 0 : i64, scratch_operands = 0 : i64, tpu.core_type = #tpu.core_type<tc>, window_params = [{transform_indices = @transform_0, window_bounds = array<i64: 1, 16, 128>}, {pipeline_mode = #tpu.pipeline_mode<synchronous>, transform_indices = @transform_1, window_bounds = array<i64: 3, 128, 128>}, {transform_indices = @transform_2, window_bounds = array<i64: 1, 16, 128>}, {pipeline_mode = #tpu.pipeline_mode<synchronous>, transform_indices = @transform_3, window_bounds = array<i64: 2, 128>}]} {
    %c0_i32 = arith.constant 0 : i32
    %0 = arith.cmpi eq, %arg0, %c0_i32 : i32
    %1 = arith.extui %0 : i1 to i32
    %c0_i32_0 = arith.constant 0 : i32
    %2 = arith.cmpi ne, %1, %c0_i32_0 : i32
    scf.if %2 {
      %cst_25 = arith.constant 0.000000e+00 : f32
      %42 = vector.broadcast %cst_25 : f32 to vector<2x128xf32>
      %c0_26 = arith.constant 0 : index
      %c0_27 = arith.constant 0 : index
      %43 = vector.load %arg4[%c0_26, %c0_27] : memref<2x128xf32, #tpu.memory_space<vmem>>, vector<2x128xf32>
      tpu.vector_store %arg4[%c0_26, %c0_27], %42 {strides = array<i32>} : memref<2x128xf32, #tpu.memory_space<vmem>>, vector<2x128xf32>,
    } else {
    }
    %c0 = arith.constant 0 : index
    %c0_1 = arith.constant 0 : index
    %c0_2 = arith.constant 0 : index
    %3 = vector.load %arg1[%c0, %c0_1, %c0_2] : memref<1x16x128xf32, #tpu.memory_space<vmem>>, vector<1x16x128xf32>
    %4 = vector.shape_cast %3 : vector<1x16x128xf32> to vector<16x128xf32>
    %5 = tpu.iota {dimensions = array<i32: 0>} : vector<16x128xi32>
    %c0_i32_3 = arith.constant 0 : i32
    %6 = vector.broadcast %c0_i32_3 : i32 to vector<16x128xi32>
    %7 = arith.cmpi eq, %5, %6 : vector<16x128xi32>
    %c1_i32 = arith.constant 1 : i32
    %8 = tpu.dynamic_rotate %4 by %c1_i32 dim 0 : vector<16x128xf32>, i32 -> vector<16x128xf32>
    %cst = arith.constant 0.000000e+00 : f32
    %9 = vector.broadcast %cst : f32 to vector<16x128xf32>
    %10 = arith.select %7, %9, %8 : vector<16x128xi1>, vector<16x128xf32>
    %c15_i32 = arith.constant 15 : i32
    %11 = vector.broadcast %c15_i32 : i32 to vector<16x128xi32>
    %12 = arith.cmpi eq, %5, %11 : vector<16x128xi32>
    %c15_i32_4 = arith.constant 15 : i32
    %13 = tpu.dynamic_rotate %4 by %c15_i32_4 dim 0 : vector<16x128xf32>, i32 -> vector<16x128xf32>
    %cst_5 = arith.constant 0.000000e+00 : f32
    %14 = vector.broadcast %cst_5 : f32 to vector<16x128xf32>
    %15 = arith.select %12, %14, %13 : vector<16x128xi1>, vector<16x128xf32>
    %16 = arith.truncf %10 : vector<16x128xf32> to vector<16x128xbf16>
    %c0_6 = arith.constant 0 : index
    %c0_7 = arith.constant 0 : index
    %c0_8 = arith.constant 0 : index
    %17 = vector.load %arg2[%c0_6, %c0_7, %c0_8] : memref<3x128x128xbf16, #tpu.memory_space<vmem>>, vector<1x128x128xbf16>
    %18 = vector.shape_cast %17 : vector<1x128x128xbf16> to vector<128x128xbf16>
    %cst_9 = arith.constant dense<0.000000e+00> : vector<16x128xf32>
    %19 = tpu.matmul %16, %18, %cst_9 {dimension_numbers = #tpu.dot_dimension_numbers<[1], [0], [0], [1], [0, 0, 1, 1], [], []>} : vector<16x128xbf16>, vector<128x128xbf16>, vector<16x128xf32> -> vector<16x128xf32>
    %20 = arith.truncf %4 : vector<16x128xf32> to vector<16x128xbf16>
    %c1 = arith.constant 1 : index
    %c0_10 = arith.constant 0 : index
    %c0_11 = arith.constant 0 : index
    %21 = vector.load %arg2[%c1, %c0_10, %c0_11] : memref<3x128x128xbf16, #tpu.memory_space<vmem>>, vector<1x128x128xbf16>
    %22 = vector.shape_cast %21 : vector<1x128x128xbf16> to vector<128x128xbf16>
    %cst_12 = arith.constant dense<0.000000e+00> : vector<16x128xf32>
    %23 = tpu.matmul %20, %22, %cst_12 {dimension_numbers = #tpu.dot_dimension_numbers<[1], [0], [0], [1], [0, 0, 1, 1], [], []>} : vector<16x128xbf16>, vector<128x128xbf16>, vector<16x128xf32> -> vector<16x128xf32>
    %24 = arith.addf %19, %23 : vector<16x128xf32>
    %25 = arith.truncf %15 : vector<16x128xf32> to vector<16x128xbf16>
    %c2 = arith.constant 2 : index
    %c0_13 = arith.constant 0 : index
    %c0_14 = arith.constant 0 : index
    %26 = vector.load %arg2[%c2, %c0_13, %c0_14] : memref<3x128x128xbf16, #tpu.memory_space<vmem>>, vector<1x128x128xbf16>
    %27 = vector.shape_cast %26 : vector<1x128x128xbf16> to vector<128x128xbf16>
    %cst_15 = arith.constant dense<0.000000e+00> : vector<16x128xf32>
    %28 = tpu.matmul %25, %27, %cst_15 {dimension_numbers = #tpu.dot_dimension_numbers<[1], [0], [0], [1], [0, 0, 1, 1], [], []>} : vector<16x128xbf16>, vector<128x128xbf16>, vector<16x128xf32> -> vector<16x128xf32>
    %29 = arith.addf %24, %28 : vector<16x128xf32>
    %c0_16 = arith.constant 0 : index
    %c0_17 = arith.constant 0 : index
    %c0_18 = arith.constant 0 : index
    %30 = vector.load %arg3[%c0_16, %c0_17, %c0_18] : memref<1x16x128xf32, #tpu.memory_space<vmem>>, vector<1x16x128xf32>
    %31 = vector.shape_cast %30 : vector<1x16x128xf32> to vector<16x128xf32>
    %32 = vector.shape_cast %29 : vector<16x128xf32> to vector<1x16x128xf32>
    tpu.vector_store %arg3[%c0_16, %c0_17, %c0_18], %32 {strides = array<i32>} : memref<1x16x128xf32, #tpu.memory_space<vmem>>, vector<1x16x128xf32>,
    %c0_19 = arith.constant 0 : index
    %c0_20 = arith.constant 0 : index
    %33 = vector.load %arg4[%c0_19, %c0_20] : memref<2x128xf32, #tpu.memory_space<vmem>>, vector<2x128xf32>
    %cst_21 = arith.constant dense<0.000000e+00> : vector<128xf32>
    %34 = vector.multi_reduction <add>, %29, %cst_21 [0] : vector<16x128xf32> to vector<128xf32>
    %35 = vector.shape_cast %34 : vector<128xf32> to vector<1x128xf32>
    %36 = arith.mulf %29, %29 : vector<16x128xf32>
    %cst_22 = arith.constant dense<0.000000e+00> : vector<128xf32>
    %37 = vector.multi_reduction <add>, %36, %cst_22 [0] : vector<16x128xf32> to vector<128xf32>
    %38 = vector.shape_cast %37 : vector<128xf32> to vector<1x128xf32>
    %39 = tpu.concatenate %35, %38 in 0 : vector<1x128xf32>, vector<1x128xf32> -> vector<2x128xf32>
    %40 = arith.addf %33, %39 : vector<2x128xf32>
    %c0_23 = arith.constant 0 : index
    %c0_24 = arith.constant 0 : index
    %41 = vector.load %arg4[%c0_23, %c0_24] : memref<2x128xf32, #tpu.memory_space<vmem>>, vector<2x128xf32>
    tpu.vector_store %arg4[%c0_23, %c0_24], %40 {strides = array<i32>} : memref<2x128xf32, #tpu.memory_space<vmem>>, vector<2x128xf32>,
    return
  }
  func.func @transform_0(%arg0: i32) -> (i32, i32, i32) {
    %c0_i32 = arith.constant 0 : i32
    %c0_i32_0 = arith.constant 0 : i32
    %c0_i32_1 = arith.constant 0 : i32
    return %arg0, %c0_i32, %c0_i32_0 : i32, i32, i32
  }
  func.func @transform_1(%arg0: i32) -> (i32, i32, i32) {
    %c0_i32 = arith.constant 0 : i32
    %c0_i32_0 = arith.constant 0 : i32
    %c0_i32_1 = arith.constant 0 : i32
    %c0_i32_2 = arith.constant 0 : i32
    return %c0_i32, %c0_i32_0, %c0_i32_1 : i32, i32, i32
  }
  func.func @transform_2(%arg0: i32) -> (i32, i32, i32) {
    %c0_i32 = arith.constant 0 : i32
    %c0_i32_0 = arith.constant 0 : i32
    %c0_i32_1 = arith.constant 0 : i32
    return %arg0, %c0_i32, %c0_i32_0 : i32, i32, i32
  }
  func.func @transform_3(%arg0: i32) -> (i32, i32) {
    %c0_i32 = arith.constant 0 : i32
    %c0_i32_0 = arith.constant 0 : i32
    %c0_i32_1 = arith.constant 0 : i32
    return %c0_i32, %c0_i32_0 : i32, i32
  }
}

module attributes {stable_mosaic.version = 11 : i64} {
  func.func @_bn_add_relu_kernel(%arg0: i32, %arg1: memref<1x16x128xf32, #tpu.memory_space<vmem>>, %arg2: memref<1x16x128xf32, #tpu.memory_space<vmem>>, %arg3: memref<2x128xf32, #tpu.memory_space<vmem>>, %arg4: memref<1x16x128xf32, #tpu.memory_space<vmem>>) attributes {dimension_semantics = [#tpu.dimension_semantics<parallel>], iteration_bounds = array<i64: 2>, scalar_prefetch = 0 : i64, scratch_operands = 0 : i64, tpu.core_type = #tpu.core_type<tc>, window_params = [{transform_indices = @transform_0, window_bounds = array<i64: 1, 16, 128>}, {transform_indices = @transform_1, window_bounds = array<i64: 1, 16, 128>}, {pipeline_mode = #tpu.pipeline_mode<synchronous>, transform_indices = @transform_2, window_bounds = array<i64: 2, 128>}, {transform_indices = @transform_3, window_bounds = array<i64: 1, 16, 128>}]} {
    %c0 = arith.constant 0 : index
    %c0_0 = arith.constant 0 : index
    %c0_1 = arith.constant 0 : index
    %0 = vector.load %arg1[%c0, %c0_0, %c0_1] : memref<1x16x128xf32, #tpu.memory_space<vmem>>, vector<1x16x128xf32>
    %1 = vector.shape_cast %0 : vector<1x16x128xf32> to vector<16x128xf32>
    %c0_2 = arith.constant 0 : index
    %c0_3 = arith.constant 0 : index
    %2 = vector.load %arg3[%c0_2, %c0_3] : memref<2x128xf32, #tpu.memory_space<vmem>>, vector<1x128xf32>
    %3 = vector.broadcast %2 : vector<1x128xf32> to vector<16x128xf32>
    %4 = arith.mulf %1, %3 : vector<16x128xf32>
    %c1 = arith.constant 1 : index
    %c0_4 = arith.constant 0 : index
    %5 = vector.load %arg3[%c1, %c0_4] : memref<2x128xf32, #tpu.memory_space<vmem>>, vector<1x128xf32>
    %6 = vector.broadcast %5 : vector<1x128xf32> to vector<16x128xf32>
    %7 = arith.addf %4, %6 : vector<16x128xf32>
    %c0_5 = arith.constant 0 : index
    %c0_6 = arith.constant 0 : index
    %c0_7 = arith.constant 0 : index
    %8 = vector.load %arg2[%c0_5, %c0_6, %c0_7] : memref<1x16x128xf32, #tpu.memory_space<vmem>>, vector<1x16x128xf32>
    %9 = vector.shape_cast %8 : vector<1x16x128xf32> to vector<16x128xf32>
    %10 = arith.addf %7, %9 : vector<16x128xf32>
    %cst = arith.constant 0.000000e+00 : f32
    %11 = vector.broadcast %cst : f32 to vector<16x128xf32>
    %12 = arith.maximumf %10, %11 : vector<16x128xf32>
    %c0_8 = arith.constant 0 : index
    %c0_9 = arith.constant 0 : index
    %c0_10 = arith.constant 0 : index
    %13 = vector.load %arg4[%c0_8, %c0_9, %c0_10] : memref<1x16x128xf32, #tpu.memory_space<vmem>>, vector<1x16x128xf32>
    %14 = vector.shape_cast %13 : vector<1x16x128xf32> to vector<16x128xf32>
    %15 = vector.shape_cast %12 : vector<16x128xf32> to vector<1x16x128xf32>
    tpu.vector_store %arg4[%c0_8, %c0_9, %c0_10], %15 {strides = array<i32>} : memref<1x16x128xf32, #tpu.memory_space<vmem>>, vector<1x16x128xf32>,
    return
  }
  func.func @transform_0(%arg0: i32) -> (i32, i32, i32) {
    %c0_i32 = arith.constant 0 : i32
    %c0_i32_0 = arith.constant 0 : i32
    %c0_i32_1 = arith.constant 0 : i32
    return %arg0, %c0_i32, %c0_i32_0 : i32, i32, i32
  }
  func.func @transform_1(%arg0: i32) -> (i32, i32, i32) {
    %c0_i32 = arith.constant 0 : i32
    %c0_i32_0 = arith.constant 0 : i32
    %c0_i32_1 = arith.constant 0 : i32
    return %arg0, %c0_i32, %c0_i32_0 : i32, i32, i32
  }
  func.func @transform_2(%arg0: i32) -> (i32, i32) {
    %c0_i32 = arith.constant 0 : i32
    %c0_i32_0 = arith.constant 0 : i32
    %c0_i32_1 = arith.constant 0 : i32
    return %c0_i32, %c0_i32_0 : i32, i32
  }
  func.func @transform_3(%arg0: i32) -> (i32, i32, i32) {
    %c0_i32 = arith.constant 0 : i32
    %c0_i32_0 = arith.constant 0 : i32
    %c0_i32_1 = arith.constant 0 : i32
    return %arg0, %c0_i32, %c0_i32_0 : i32, i32, i32
  }
}

module attributes {stable_mosaic.version = 11 : i64} {
  func.func @_bn_relu_conv_stats_kernel(%arg0: i32, %arg1: memref<1x16x128xf32, #tpu.memory_space<vmem>>, %arg2: memref<2x128xf32, #tpu.memory_space<vmem>>, %arg3: memref<3x128x128xbf16, #tpu.memory_space<vmem>>, %arg4: memref<1x16x128xf32, #tpu.memory_space<vmem>>, %arg5: memref<2x128xf32, #tpu.memory_space<vmem>>) attributes {dimension_semantics = [#tpu.dimension_semantics<arbitrary>], iteration_bounds = array<i64: 2>, scalar_prefetch = 0 : i64, scratch_operands = 0 : i64, tpu.core_type = #tpu.core_type<tc>, window_params = [{transform_indices = @transform_0, window_bounds = array<i64: 1, 16, 128>}, {pipeline_mode = #tpu.pipeline_mode<synchronous>, transform_indices = @transform_1, window_bounds = array<i64: 2, 128>}, {pipeline_mode = #tpu.pipeline_mode<synchronous>, transform_indices = @transform_2, window_bounds = array<i64: 3, 128, 128>}, {transform_indices = @transform_3, window_bounds = array<i64: 1, 16, 128>}, {pipeline_mode = #tpu.pipeline_mode<synchronous>, transform_indices = @transform_4, window_bounds = array<i64: 2, 128>}]} {
    %c0_i32 = arith.constant 0 : i32
    %0 = arith.cmpi eq, %arg0, %c0_i32 : i32
    %1 = arith.extui %0 : i1 to i32
    %c0_i32_0 = arith.constant 0 : i32
    %2 = arith.cmpi ne, %1, %c0_i32_0 : i32
    scf.if %2 {
      %cst_30 = arith.constant 0.000000e+00 : f32
      %50 = vector.broadcast %cst_30 : f32 to vector<2x128xf32>
      %c0_31 = arith.constant 0 : index
      %c0_32 = arith.constant 0 : index
      %51 = vector.load %arg5[%c0_31, %c0_32] : memref<2x128xf32, #tpu.memory_space<vmem>>, vector<2x128xf32>
      tpu.vector_store %arg5[%c0_31, %c0_32], %50 {strides = array<i32>} : memref<2x128xf32, #tpu.memory_space<vmem>>, vector<2x128xf32>,
    } else {
    }
    %c0 = arith.constant 0 : index
    %c0_1 = arith.constant 0 : index
    %c0_2 = arith.constant 0 : index
    %3 = vector.load %arg1[%c0, %c0_1, %c0_2] : memref<1x16x128xf32, #tpu.memory_space<vmem>>, vector<1x16x128xf32>
    %4 = vector.shape_cast %3 : vector<1x16x128xf32> to vector<16x128xf32>
    %c0_3 = arith.constant 0 : index
    %c0_4 = arith.constant 0 : index
    %5 = vector.load %arg2[%c0_3, %c0_4] : memref<2x128xf32, #tpu.memory_space<vmem>>, vector<1x128xf32>
    %6 = vector.broadcast %5 : vector<1x128xf32> to vector<16x128xf32>
    %7 = arith.mulf %4, %6 : vector<16x128xf32>
    %c1 = arith.constant 1 : index
    %c0_5 = arith.constant 0 : index
    %8 = vector.load %arg2[%c1, %c0_5] : memref<2x128xf32, #tpu.memory_space<vmem>>, vector<1x128xf32>
    %9 = vector.broadcast %8 : vector<1x128xf32> to vector<16x128xf32>
    %10 = arith.addf %7, %9 : vector<16x128xf32>
    %cst = arith.constant 0.000000e+00 : f32
    %11 = vector.broadcast %cst : f32 to vector<16x128xf32>
    %12 = arith.maximumf %10, %11 : vector<16x128xf32>
    %13 = tpu.iota {dimensions = array<i32: 0>} : vector<16x128xi32>
    %c0_i32_6 = arith.constant 0 : i32
    %14 = vector.broadcast %c0_i32_6 : i32 to vector<16x128xi32>
    %15 = arith.cmpi eq, %13, %14 : vector<16x128xi32>
    %c1_i32 = arith.constant 1 : i32
    %16 = tpu.dynamic_rotate %12 by %c1_i32 dim 0 : vector<16x128xf32>, i32 -> vector<16x128xf32>
    %cst_7 = arith.constant 0.000000e+00 : f32
    %17 = vector.broadcast %cst_7 : f32 to vector<16x128xf32>
    %18 = arith.select %15, %17, %16 : vector<16x128xi1>, vector<16x128xf32>
    %c15_i32 = arith.constant 15 : i32
    %19 = vector.broadcast %c15_i32 : i32 to vector<16x128xi32>
    %20 = arith.cmpi eq, %13, %19 : vector<16x128xi32>
    %c15_i32_8 = arith.constant 15 : i32
    %21 = tpu.dynamic_rotate %12 by %c15_i32_8 dim 0 : vector<16x128xf32>, i32 -> vector<16x128xf32>
    %cst_9 = arith.constant 0.000000e+00 : f32
    %22 = vector.broadcast %cst_9 : f32 to vector<16x128xf32>
    %23 = arith.select %20, %22, %21 : vector<16x128xi1>, vector<16x128xf32>
    %24 = arith.truncf %18 : vector<16x128xf32> to vector<16x128xbf16>
    %c0_10 = arith.constant 0 : index
    %c0_11 = arith.constant 0 : index
    %c0_12 = arith.constant 0 : index
    %25 = vector.load %arg3[%c0_10, %c0_11, %c0_12] : memref<3x128x128xbf16, #tpu.memory_space<vmem>>, vector<1x128x128xbf16>
    %26 = vector.shape_cast %25 : vector<1x128x128xbf16> to vector<128x128xbf16>
    %cst_13 = arith.constant dense<0.000000e+00> : vector<16x128xf32>
    %27 = tpu.matmul %24, %26, %cst_13 {dimension_numbers = #tpu.dot_dimension_numbers<[1], [0], [0], [1], [0, 0, 1, 1], [], []>} : vector<16x128xbf16>, vector<128x128xbf16>, vector<16x128xf32> -> vector<16x128xf32>
    %28 = arith.truncf %12 : vector<16x128xf32> to vector<16x128xbf16>
    %c1_14 = arith.constant 1 : index
    %c0_15 = arith.constant 0 : index
    %c0_16 = arith.constant 0 : index
    %29 = vector.load %arg3[%c1_14, %c0_15, %c0_16] : memref<3x128x128xbf16, #tpu.memory_space<vmem>>, vector<1x128x128xbf16>
    %30 = vector.shape_cast %29 : vector<1x128x128xbf16> to vector<128x128xbf16>
    %cst_17 = arith.constant dense<0.000000e+00> : vector<16x128xf32>
    %31 = tpu.matmul %28, %30, %cst_17 {dimension_numbers = #tpu.dot_dimension_numbers<[1], [0], [0], [1], [0, 0, 1, 1], [], []>} : vector<16x128xbf16>, vector<128x128xbf16>, vector<16x128xf32> -> vector<16x128xf32>
    %32 = arith.addf %27, %31 : vector<16x128xf32>
    %33 = arith.truncf %23 : vector<16x128xf32> to vector<16x128xbf16>
    %c2 = arith.constant 2 : index
    %c0_18 = arith.constant 0 : index
    %c0_19 = arith.constant 0 : index
    %34 = vector.load %arg3[%c2, %c0_18, %c0_19] : memref<3x128x128xbf16, #tpu.memory_space<vmem>>, vector<1x128x128xbf16>
    %35 = vector.shape_cast %34 : vector<1x128x128xbf16> to vector<128x128xbf16>
    %cst_20 = arith.constant dense<0.000000e+00> : vector<16x128xf32>
    %36 = tpu.matmul %33, %35, %cst_20 {dimension_numbers = #tpu.dot_dimension_numbers<[1], [0], [0], [1], [0, 0, 1, 1], [], []>} : vector<16x128xbf16>, vector<128x128xbf16>, vector<16x128xf32> -> vector<16x128xf32>
    %37 = arith.addf %32, %36 : vector<16x128xf32>
    %c0_21 = arith.constant 0 : index
    %c0_22 = arith.constant 0 : index
    %c0_23 = arith.constant 0 : index
    %38 = vector.load %arg4[%c0_21, %c0_22, %c0_23] : memref<1x16x128xf32, #tpu.memory_space<vmem>>, vector<1x16x128xf32>
    %39 = vector.shape_cast %38 : vector<1x16x128xf32> to vector<16x128xf32>
    %40 = vector.shape_cast %37 : vector<16x128xf32> to vector<1x16x128xf32>
    tpu.vector_store %arg4[%c0_21, %c0_22, %c0_23], %40 {strides = array<i32>} : memref<1x16x128xf32, #tpu.memory_space<vmem>>, vector<1x16x128xf32>,
    %c0_24 = arith.constant 0 : index
    %c0_25 = arith.constant 0 : index
    %41 = vector.load %arg5[%c0_24, %c0_25] : memref<2x128xf32, #tpu.memory_space<vmem>>, vector<2x128xf32>
    %cst_26 = arith.constant dense<0.000000e+00> : vector<128xf32>
    %42 = vector.multi_reduction <add>, %37, %cst_26 [0] : vector<16x128xf32> to vector<128xf32>
    %43 = vector.shape_cast %42 : vector<128xf32> to vector<1x128xf32>
    %44 = arith.mulf %37, %37 : vector<16x128xf32>
    %cst_27 = arith.constant dense<0.000000e+00> : vector<128xf32>
    %45 = vector.multi_reduction <add>, %44, %cst_27 [0] : vector<16x128xf32> to vector<128xf32>
    %46 = vector.shape_cast %45 : vector<128xf32> to vector<1x128xf32>
    %47 = tpu.concatenate %43, %46 in 0 : vector<1x128xf32>, vector<1x128xf32> -> vector<2x128xf32>
    %48 = arith.addf %41, %47 : vector<2x128xf32>
    %c0_28 = arith.constant 0 : index
    %c0_29 = arith.constant 0 : index
    %49 = vector.load %arg5[%c0_28, %c0_29] : memref<2x128xf32, #tpu.memory_space<vmem>>, vector<2x128xf32>
    tpu.vector_store %arg5[%c0_28, %c0_29], %48 {strides = array<i32>} : memref<2x128xf32, #tpu.memory_space<vmem>>, vector<2x128xf32>,
    return
  }
  func.func @transform_0(%arg0: i32) -> (i32, i32, i32) {
    %c0_i32 = arith.constant 0 : i32
    %c0_i32_0 = arith.constant 0 : i32
    %c0_i32_1 = arith.constant 0 : i32
    return %arg0, %c0_i32, %c0_i32_0 : i32, i32, i32
  }
  func.func @transform_1(%arg0: i32) -> (i32, i32) {
    %c0_i32 = arith.constant 0 : i32
    %c0_i32_0 = arith.constant 0 : i32
    %c0_i32_1 = arith.constant 0 : i32
    return %c0_i32, %c0_i32_0 : i32, i32
  }
  func.func @transform_2(%arg0: i32) -> (i32, i32, i32) {
    %c0_i32 = arith.constant 0 : i32
    %c0_i32_0 = arith.constant 0 : i32
    %c0_i32_1 = arith.constant 0 : i32
    %c0_i32_2 = arith.constant 0 : i32
    return %c0_i32, %c0_i32_0, %c0_i32_1 : i32, i32, i32
  }
  func.func @transform_3(%arg0: i32) -> (i32, i32, i32) {
    %c0_i32 = arith.constant 0 : i32
    %c0_i32_0 = arith.constant 0 : i32
    %c0_i32_1 = arith.constant 0 : i32
    return %arg0, %c0_i32, %c0_i32_0 : i32, i32, i32
  }
  func.func @transform_4(%arg0: i32) -> (i32, i32) {
    %c0_i32 = arith.constant 0 : i32
    %c0_i32_0 = arith.constant 0 : i32
    %c0_i32_1 = arith.constant 0 : i32
    return %c0_i32, %c0_i32_0 : i32, i32
  }
}

</mosaic_0001>

<llo_original>
// kernel: tile.28
$region0: #{tile.28}
  #allocation0 [shape = 's32[1]{0}', space=sflag, size = 0x4, scoped, tag = 'scoped memory for tile.28']
  %s0 = inlined_call_operand.vmem [shape: f32[4], index: 0, kind: input, shape index: {}]
  %s1 = inlined_call_operand.vmem [shape: f32[16,4], index: 1, kind: output, shape index: {}]
  // Predicated region
  $region2: #{tile.28} parent=0 // pred_check
    _
  $region3: #{tile.28} parent=0 // pred_check_branch
    %3 = sbr.rel (0) target = $region5
  $region4: #{tile.28} parent=0 // pred_region
    _
  $region5: #{tile.28} parent=0 // pred_fallthru
    _
  %v4 = vld [vmem:[%s0] ss:$0 sm:$0xff]
  %5 = vst [vmem:[%s1] sm:$0xff] %v4
  %s6 = scalar_lea.vmem %s1, 8
  %7 = vst [vmem:[%s6] sm:$0xff] %v4

// kernel: tile.29
$region0: #{tile.29}
  %s0 = inlined_call_operand.vmem [shape: f32[16,4], index: 0, kind: input, shape index: {}]
  %s1 = inlined_call_operand.vmem [shape: f32[64], index: 1, kind: output, shape index: {}]
  $region1: #{tile.29} parent=0
    #allocation0 [shape = 'u8[4096]{0}', space=vmem, size = 0x1000, scoped, tag = 'scoped mem for output reshape']
    %v2 = vld [vmem:[%s0] sm:$0x1]
    %vm3 = vcmask 31744
    %4 = vst.msk [vmem:[#allocation0] sm:$0x1] %vm3, %v2
    %s5 = scalar_lea.vmem %s0, 15
    %v6 = vld [vmem:[%s5] sm:$0x1]
    %7 = vrot.lane.b32.xlu0 %v6, 60
    %v8 = vpop.permute.xlu0 %7
    %vm9 = vcmask 523744
    %10 = vst.msk [vmem:[#allocation0] sm:$0x1] %vm9, %v8
    %s11 = scalar_lea.vmem %s0, 14
    %v12 = vld [vmem:[%s11] sm:$0x1]
    %13 = vrot.lane.b32.xlu0 %v12, 56
    %v14 = vpop.permute.xlu0 %13
    %vm15 = vcmask 490944
    %16 = vst.msk [vmem:[#allocation0] sm:$0x1] %vm15, %v14
    %s17 = scalar_lea.vmem %s0, 13
    %v18 = vld [vmem:[%s17] sm:$0x1]
    %19 = vrot.lane.b32.xlu0 %v18, 52
    %v20 = vpop.permute.xlu0 %19
    %vm21 = vcmask 458144
    %22 = vst.msk [vmem:[#allocation0] sm:$0x1] %vm21, %v20
    %s23 = scalar_lea.vmem %s0, 12
    %v24 = vld [vmem:[%s23] sm:$0x1]
    %25 = vrot.lane.b32.xlu0 %v24, 48
    %v26 = vpop.permute.xlu0 %25
    %vm27 = vcmask 425344
    %28 = vst.msk [vmem:[#allocation0] sm:$0x1] %vm27, %v26
    %s29 = scalar_lea.vmem %s0, 11
    %v30 = vld [vmem:[%s29] sm:$0x1]
    %31 = vrot.lane.b32.xlu0 %v30, 44
    %v32 = vpop.permute.xlu0 %31
    %vm33 = vcmask 392544
    %34 = vst.msk [vmem:[#allocation0] sm:$0x1] %vm33, %v32
    %s35 = scalar_lea.vmem %s0, 10
    %v36 = vld [vmem:[%s35] sm:$0x1]
    %37 = vrot.lane.b32.xlu0 %v36, 40
    %v38 = vpop.permute.xlu0 %37
    %vm39 = vcmask 359744
    %40 = vst.msk [vmem:[#allocation0] sm:$0x1] %vm39, %v38
    %s41 = scalar_lea.vmem %s0, 9
    %v42 = vld [vmem:[%s41] sm:$0x1]
    %43 = vrot.lane.b32.xlu0 %v42, 36
    %v44 = vpop.permute.xlu0 %43
    %vm45 = vcmask 326944
    %46 = vst.msk [vmem:[#allocation0] sm:$0x1] %vm45, %v44
    %s47 = scalar_lea.vmem %s0, 8
    %v48 = vld [vmem:[%s47] sm:$0x1]
    %49 = vrot.lane.b32.xlu0 %v48, 32
    %v50 = vpop.permute.xlu0 %49
    %vm51 = vcmask 294144
    %52 = vst.msk [vmem:[#allocation0] sm:$0x1] %vm51, %v50
    %s53 = scalar_lea.vmem %s0, 7
    %v54 = vld [vmem:[%s53] sm:$0x1]
    %55 = vrot.lane.b32.xlu0 %v54, 28
    %v56 = vpop.permute.xlu0 %55
    %vm57 = vcmask 261344
    %58 = vst.msk [vmem:[#allocation0] sm:$0x1] %vm57, %v56
    %s59 = scalar_lea.vmem %s0, 6
    %v60 = vld [vmem:[%s59] sm:$0x1]
    %61 = vrot.lane.b32.xlu0 %v60, 24
    %v62 = vpop.permute.xlu0 %61
    %vm63 = vcmask 228544
    %64 = vst.msk [vmem:[#allocation0] sm:$0x1] %vm63, %v62
    %s65 = scalar_lea.vmem %s0, 5
    %v66 = vld [vmem:[%s65] sm:$0x1]
    %67 = vrot.lane.b32.xlu0 %v66, 20
    %v68 = vpop.permute.xlu0 %67
    %vm69 = vcmask 195744
    %70 = vst.msk [vmem:[#allocation0] sm:$0x1] %vm69, %v68
    %s71 = scalar_lea.vmem %s0, 4
    %v72 = vld [vmem:[%s71] sm:$0x1]
    %73 = vrot.lane.b32.xlu0 %v72, 16
    %v74 = vpop.permute.xlu0 %73
    %vm75 = vcmask 162944
    %76 = vst.msk [vmem:[#allocation0] sm:$0x1] %vm75, %v74
    %s77 = scalar_lea.vmem %s0, 3
    %v78 = vld [vmem:[%s77] sm:$0x1]
    %79 = vrot.lane.b32.xlu0 %v78, 12
    %v80 = vpop.permute.xlu0 %79
    %vm81 = vcmask 130144
    %82 = vst.msk [vmem:[#allocation0] sm:$0x1] %vm81, %v80
    %s83 = scalar_lea.vmem %s0, 2
    %v84 = vld [vmem:[%s83] sm:$0x1]
    %85 = vrot.lane.b32.xlu0 %v84, 8
    %v86 = vpop.permute.xlu0 %85
    %vm87 = vcmask 97344
    %88 = vst.msk [vmem:[#allocation0] sm:$0x1] %vm87, %v86
    %s89 = scalar_lea.vmem %s0, 1
    %v90 = vld [vmem:[%s89] sm:$0x1]
    %91 = vrot.lane.b32.xlu0 %v90, 4
    %v92 = vpop.permute.xlu0 %91
    %vm93 = vcmask 64544
    %94 = vst.msk [vmem:[#allocation0] sm:$0x1] %vm93, %v92
    %s96 = sshll.u32 1, 1
    %s97 = ssub.s32 %s96, 1
    %v99 = vld [vmem:[#allocation0] sm:%s97]
    %s100 = sshll.u32 1, 1
    %s101 = ssub.s32 %s100, 1
    %102 = vst [vmem:[%s1] sm:%s101] %v99

// kernel: residual_block.3
$region0: #{residual_block.3}
  #allocation0 [shape = 'u32[]', space=smem, size = 0x4, offset = 0x4, fixed_abs, tag = 'smem constant byte address 0x4 - core index']
  #allocation1 [shape = 'u32[144,128]{1,0:T(1,128)}', space=vmem, size = 0x12000, scoped, tag = 'internal scratch']
  %s0 = inlined_call_operand.vmem [shape: f32[2,16,128], index: 0, kind: input, shape index: {}]
  %s1 = inlined_call_operand.vmem [shape: bf16[3,128,128], index: 1, kind: input, shape index: {}]
  %s2 = inlined_call_operand.vmem [shape: f32[2,16,128], index: 2, kind: output, shape index: {0}]
  %s3 = inlined_call_operand.vmem [shape: f32[2,128], index: 3, kind: output, shape index: {1}]
  %4 = xla_tuple %s2, %s3
  %s5 = sld [smem:[#allocation0]]
  $region53: #{residual_block.3} parent=0
    _
  %s7 = ssub.s32 1, %s5
  %s8 = scalar_select 0, %s7, %s5
  loop: start=0, step=1, limit=4
  $region2: #{residual_block.3} parent=0 // loop_pre_header
    _
  $region3: #{residual_block.3} parent=0 // loop_header
    %s10 = sphi 0, %s14
    %p11 = scmp.ge.s32.totalorder %s10, 4
    %s20 = sphi 0, %s22
    %s23 = sphi 0, %s20
    %s24 = sphi 0, %s23
    %s40 = sphi 0, %s24
    %s44 = sphi 0, %s44
    %s46 = sphi 0, %s44
    %s47 = sphi 0, %s46
    %s61 = sphi 0, %s47
    %s67 = sphi 0, %s69
    %s70 = sphi 0, %s67
    %s71 = sphi 0, %s70
    %s87 = sphi 0, %s71
    %s91 = sphi 0, %s91
    %s93 = sphi 0, %s91
    %s94 = sphi 0, %s93
    %s108 = sphi 0, %s94
  $region4: #{residual_block.3} parent=0 // loop_header_branch
    %13 = sbr.rel (%p11) target = $region8
  $region5: #{residual_block.3} parent=0 // loop_body
    %s15 = ssub.s32 %s10, 1
    %s16 = ssub.s32 %s10, 2
    %s17 = sadd.s32 %s10, 1
    %s18 = ssub.s32 %s10, %s17
    %p19 = scmp.eq.s32.totalorder %s18, 0
    %s21 = sadd.s32 %s20, 1
    %s22 = scalar_select %p19, %s20, %s21
    %p25 = pneg %p19
    %p26 = scmp.eq.s32.totalorder %s10, 1
    %p27 = por %p25, %p26
    %p28 = scmp.ne.s32.totalorder %s20, %s23
    %p29 = scmp.eq.s32.totalorder %s10, 0
    %p30 = por %p28, %p29
    %p31 = scmp.ne.s32.totalorder %s20, %s23
    %p32 = scmp.eq.s32.totalorder %s15, 1
    %p33 = por %p31, %p32
    %p34 = scmp.ne.s32.totalorder %s23, %s24
    %p35 = scmp.eq.s32.totalorder %s15, 0
    %p36 = por %p34, %p35
    %p37 = scmp.ne.s32.totalorder %s23, %s24
    %p38 = scmp.eq.s32.totalorder %s16, 1
    %p39 = por %p37, %p38
    %p41 = scmp.ne.s32.totalorder %s24, %s40
    %p42 = scmp.eq.s32.totalorder %s16, 0
    %p43 = por %p41, %p42
    %s45 = sadd.s32 %s44, 1
    %p48 = scmp.eq.s32.totalorder %s10, 1
    %p49 = scmp.ne.s32.totalorder %s44, %s46
    %p50 = scmp.eq.s32.totalorder %s10, 0
    %p51 = por %p49, %p50
    %p52 = scmp.ne.s32.totalorder %s44, %s46
    %p53 = scmp.eq.s32.totalorder %s15, 1
    %p54 = por %p52, %p53
    %p55 = scmp.ne.s32.totalorder %s46, %s47
    %p56 = scmp.eq.s32.totalorder %s15, 0
    %p57 = por %p55, %p56
    %p58 = scmp.ne.s32.totalorder %s46, %s47
    %p59 = scmp.eq.s32.totalorder %s16, 1
    %p60 = por %p58, %p59
    %p62 = scmp.ne.s32.totalorder %s47, %s61
    %p63 = scmp.eq.s32.totalorder %s16, 0
    %p64 = por %p62, %p63
    %s65 = ssub.s32 %s10, %s17
    %p66 = scmp.eq.s32.totalorder %s65, 0
    %s68 = sadd.s32 %s67, 1
    %s69 = scalar_select %p66, %s67, %s68
    %p72 = pneg %p66
    %p73 = scmp.eq.s32.totalorder %s10, 1
    %p74 = por %p72, %p73
    %p75 = scmp.ne.s32.totalorder %s67, %s70
    %p76 = scmp.eq.s32.totalorder %s10, 0
    %p77 = por %p75, %p76
    %p78 = scmp.ne.s32.totalorder %s67, %s70
    %p79 = scmp.eq.s32.totalorder %s15, 1
    %p80 = por %p78, %p79
    %p81 = scmp.ne.s32.totalorder %s70, %s71
    %p82 = scmp.eq.s32.totalorder %s15, 0
    %p83 = por %p81, %p82
    %p84 = scmp.ne.s32.totalorder %s70, %s71
    %p85 = scmp.eq.s32.totalorder %s16, 1
    %p86 = por %p84, %p85
    %p88 = scmp.ne.s32.totalorder %s71, %s87
    %p89 = scmp.eq.s32.totalorder %s16, 0
    %p90 = por %p88, %p89
    %s92 = sadd.s32 %s91, 1
    %p95 = scmp.eq.s32.totalorder %s10, 1
    %p96 = scmp.ne.s32.totalorder %s91, %s93
    %p97 = scmp.eq.s32.totalorder %s10, 0
    %p98 = por %p96, %p97
    %p99 = scmp.ne.s32.totalorder %s91, %s93
    %p100 = scmp.eq.s32.totalorder %s15, 1
    %p101 = por %p99, %p100
    %p102 = scmp.ne.s32.totalorder %s93, %s94
    %p103 = scmp.eq.s32.totalorder %s15, 0
    %p104 = por %p102, %p103
    %p105 = scmp.ne.s32.totalorder %s93, %s94
    %p106 = scmp.eq.s32.totalorder %s16, 1
    %p107 = por %p105, %p106
    %p109 = scmp.ne.s32.totalorder %s94, %s108
    %p110 = scmp.eq.s32.totalorder %s16, 0
    %p111 = por %p109, %p110
    %p112 = scmp.le.s32.totalorder 1, %s10
    %p113 = scmp.lt.s32.totalorder %s10, 3
    %p114 = pnand %p112, %p113
    %p115 = pneg %p114
    // Predicated region
    $region9: #{residual_block.3} parent=5 // pred_check
      _
    $region10: #{residual_block.3} parent=5 // pred_check_branch
      %117 = sbr.rel (%p114) target = $region12
    $region11: #{residual_block.3} parent=5 // pred_region
      %s118 = ssub.s32 %s10, 1
      // Predicated region
      $region13: #{residual_block.3} parent=11 // pred_check
        %p119 = pneg %p57
      $region14: #{residual_block.3} parent=11 // pred_check_branch
        %121 = sbr.rel (%p119) target = $region16
      $region15: #{residual_block.3} parent=11 // pred_region
        _
      $region16: #{residual_block.3} parent=11 // pred_fallthru
        _
    $region12: #{residual_block.3} parent=5 // pred_fallthru
      _
    %p122 = scmp.lt.s32.totalorder %s10, 2
    // Predicated region
    $region17: #{residual_block.3} parent=5 // pred_check
      %p123 = pneg %p122
    $region18: #{residual_block.3} parent=5 // pred_check_branch
      %125 = sbr.rel (%p123) target = $region20
    $region19: #{residual_block.3} parent=5 // pred_region
      // Predicated region
      $region21: #{residual_block.3} parent=19 // pred_check
        %p126 = pneg %p30
      $region22: #{residual_block.3} parent=19 // pred_check_branch
        %128 = sbr.rel (%p126) target = $region24
      $region23: #{residual_block.3} parent=19 // pred_region
        %p129 = scmp.lt.s32.totalorder %s10, 1
        %s130 = scalar_select %p129, %s10, 1
        %s131 = smul.addr %s130, 2
        %s132 = smul.addr %s131, 8
        %s133 = scalar_lea.vmem %s0, %s132
      $region24: #{residual_block.3} parent=19 // pred_fallthru
        _
    $region20: #{residual_block.3} parent=5 // pred_fallthru
      _
    %p134 = scmp.le.s32.totalorder 1, %s10
    %p135 = scmp.lt.s32.totalorder %s10, 3
    %p136 = pnand %p134, %p135
    %p137 = pneg %p136
    // Predicated region
    $region25: #{residual_block.3} parent=5 // pred_check
      _
    $region26: #{residual_block.3} parent=5 // pred_check_branch
      %139 = sbr.rel (%p136) target = $region28
    $region27: #{residual_block.3} parent=5 // pred_region
      %s140 = ssub.s32 %s10, 1
      %p141 = scmp.lt.s32.totalorder %s15, 1
      %s142 = scalar_select %p141, %s15, 1
      %s143 = smul.addr %s142, 2
      %s144 = smul.addr %s143, 8
      %s145 = scalar_lea.vmem %s0, %s144
      %p146 = pneg %p36
      %p147 = pneg %p33
      %p148 = pneg %p57
      %p149 = pneg %p54
      %p150 = pneg %p83
      %p151 = pneg %p80
      %p152 = scmp.lt.s32.totalorder %s15, 1
      %s153 = scalar_select %p152, %s15, 1
      %s154 = smul.addr %s153, 2
      %s155 = smul.addr %s154, 8
      %s156 = scalar_lea.vmem %s2, %s155
      %p157 = pneg %p104
      %p158 = pneg %p101
      %p159 = scmp.lt.s32.totalorder %s15, 1
      %s160 = scalar_select %p159, %s15, 1
      %s161 = smul.addr %s160, 2
      %s162 = smul.addr %s161, 8
      %s163 = scalar_lea.vmem %s0, %s162
      %p164 = scmp.lt.s32.totalorder %s15, 1
      %s165 = scalar_select %p164, %s15, 1
      %s166 = smul.addr %s165, 2
      %s167 = smul.addr %s166, 8
      %s168 = scalar_lea.vmem %s2, %s167
      %p170 = scmp.eq.s32.totalorder %s15, 0
      // Predicated region
      $region29: #{residual_block.3} parent=27 // pred_check
        %p171 = pneg %p170
      $region30: #{residual_block.3} parent=27 // pred_check_branch
        %173 = sbr.rel (%p171) target = $region32
      $region31: #{residual_block.3} parent=27 // pred_region
        %174 = vst [vmem:[%s3] sm:$0x3] 0.0
      $region32: #{residual_block.3} parent=27 // pred_fallthru
        _
      %v175 = vld [vmem:[%s163] sm:$0xff]
      %v176 = vld [vmem:[%s163 + $0x8] sm:$0xff]
      %v177 = vlaneseq
      %v178 = vshrl.u32 %v177, 7
      %v179 = vadd.s32 %v178, 8
      %vm180 = vcmp.eq.s32.totalorder %v178, 0
      %vm181 = vcmp.eq.s32.totalorder %v179, 0
      %v182 = vrot.slane %v175, 7
      %v183 = vrot.slane %v176, 7
      %vm184 = vcmp.lt.s32.totalorder %v178, 1
      %v185 = vsel %vm184, %v182, %v183
      %v186 = vsel %vm184, %v183, %v182
      %v187 = vsel %vm180, 0.0, %v186
      %v188 = vsel %vm181, 0.0, %v185
      %vm189 = vcmp.eq.s32.totalorder %v178, 15
      %vm190 = vcmp.eq.s32.totalorder %v179, 15
      %v191 = vrot.slane %v175, 1
      %v192 = vrot.slane %v176, 1
      %vm193 = vcmp.lt.s32.totalorder %v178, 7
      %v194 = vsel %vm193, %v191, %v192
      %v195 = vsel %vm193, %v192, %v191
      %v196 = vsel %vm189, 0.0, %v194
      %v197 = vsel %vm190, 0.0, %v195
      %v198 = vpack.c.bf16 %v188, %v187
      %v199 = vld [vmem:[%s1] sm:$0xf]
      %v200 = vld [vmem:[%s1 + $0x4] sm:$0xf]
      %v201 = vld [vmem:[%s1 + $0x8] sm:$0xf]
      %v202 = vld [vmem:[%s1 + $0xc] sm:$0xf]
      %v203 = vld [vmem:[%s1 + $0x10] sm:$0xf]
      %v204 = vld [vmem:[%s1 + $0x14] sm:$0xf]
      %v205 = vld [vmem:[%s1 + $0x18] sm:$0xf]
      %v206 = vld [vmem:[%s1 + $0x1c] sm:$0xf]
      %v207 = vld [vmem:[%s1 + $0x20] sm:$0xf]
      %v208 = vld [vmem:[%s1 + $0x24] sm:$0xf]
      %v209 = vld [vmem:[%s1 + $0x28] sm:$0xf]
      %v210 = vld [vmem:[%s1 + $0x2c] sm:$0xf]
      %v211 = vld [vmem:[%s1 + $0x30] sm:$0xf]
      %v212 = vld [vmem:[%s1 + $0x34] sm:$0xf]
      %v213 = vld [vmem:[%s1 + $0x38] sm:$0xf]
      %v214 = vld [vmem:[%s1 + $0x3c] sm:$0xf]
      %v215 = vpack.c.bf16 %v176, %v175
      %s216 = scalar_lea.vmem %s1, 64
      %v217 = vld [vmem:[%s216] sm:$0xf]
      %v218 = vld [vmem:[%s216 + $0x4] sm:$0xf]
      %v219 = vld [vmem:[%s216 + $0x8] sm:$0xf]
      %v220 = vld [vmem:[%s216 + $0xc] sm:$0xf]
      %v221 = vld [vmem:[%s216 + $0x10] sm:$0xf]
      %v222 = vld [vmem:[%s216 + $0x14] sm:$0xf]
      %v223 = vld [vmem:[%s216 + $0x18] sm:$0xf]
      %v224 = vld [vmem:[%s216 + $0x1c] sm:$0xf]
      %v225 = vld [vmem:[%s216 + $0x20] sm:$0xf]
      %v226 = vld [vmem:[%s216 + $0x24] sm:$0xf]
      %v227 = vld [vmem:[%s216 + $0x28] sm:$0xf]
      %v228 = vld [vmem:[%s216 + $0x2c] sm:$0xf]
      %v229 = vld [vmem:[%s216 + $0x30] sm:$0xf]
      %v230 = vld [vmem:[%s216 + $0x34] sm:$0xf]
      %v231 = vld [vmem:[%s216 + $0x38] sm:$0xf]
      %v232 = vld [vmem:[%s216 + $0x3c] sm:$0xf]
      %v249 = vunpack.c.l.b16 %v217
      %v250 = vunpack.c.l.b16 %v218
      %v251 = vunpack.c.l.b16 %v219
      %v252 = vunpack.c.l.b16 %v220
      %v253 = vunpack.c.l.b16 %v221
      %v254 = vunpack.c.l.b16 %v222
      %v255 = vunpack.c.l.b16 %v223
      %v256 = vunpack.c.l.b16 %v224
      %v257 = vunpack.c.l.b16 %v225
      %v258 = vunpack.c.l.b16 %v226
      %v259 = vunpack.c.l.b16 %v227
      %v260 = vunpack.c.l.b16 %v228
      %v261 = vunpack.c.l.b16 %v229
      %v262 = vunpack.c.l.b16 %v230
      %v263 = vunpack.c.l.b16 %v231
      %v264 = vunpack.c.l.b16 %v232
      %v265 = vpack.c.b16 %v250, %v249
      %v266 = vpack.c.b16 %v252, %v251
      %v267 = vpack.c.b16 %v254, %v253
      %v268 = vpack.c.b16 %v256, %v255
      %v269 = vpack.c.b16 %v258, %v257
      %v270 = vpack.c.b16 %v260, %v259
      %v271 = vpack.c.b16 %v262, %v261
      %v272 = vpack.c.b16 %v264, %v263
      %281 = vmatprep.subr.bf16.mxu0 0
      %282 = vmatpush1.bf16.msra.mxu0 %v272
      %283 = vmatprep.subr.bf16.mxu0 0
      %284 = vmatpush1.bf16.msra.mxu0 %v271
      %285 = vmatprep.subr.bf16.mxu0 0
      %286 = vmatpush1.bf16.msra.mxu0 %v270
      %287 = vmatprep.subr.bf16.mxu0 0
      %288 = vmatpush1.bf16.msra.mxu0 %v269
      %289 = vmatprep.subr.bf16.mxu0 0
      %290 = vmatpush1.bf16.msra.mxu0 %v268
      %291 = vmatprep.subr.bf16.mxu0 0
      %292 = vmatpush1.bf16.msra.mxu0 %v267
      %293 = vmatprep.subr.bf16.mxu0 0
      %294 = vmatpush1.bf16.msra.mxu0 %v266
      %295 = vmatprep.subr.bf16.mxu0 0
      %296 = vmatpush1.bf16.msra.mxu0 %v265
      %297 = vmatprep.subr.bf16.mxu0 0
      %298 = vmatpush2.bf16.msra.mxu0 0
      %299 = vmatprep.subr.bf16.mxu0 0
      %300 = vmatpush2.bf16.msra.mxu0 0
      %301 = vmatprep.subr.bf16.mxu0 0
      %302 = vmatpush2.bf16.msra.mxu0 0
      %303 = vmatprep.subr.bf16.mxu0 0
      %304 = vmatpush2.bf16.msra.mxu0 0
      %305 = vmatprep.subr.bf16.mxu0 0
      %306 = vmatpush2.bf16.msra.mxu0 0
      %307 = vmatprep.subr.bf16.mxu0 0
      %308 = vmatpush2.bf16.msra.mxu0 0
      %309 = vmatprep.subr.bf16.mxu0 0
      %310 = vmatpush2.bf16.msra.mxu0 0
      %311 = vmatprep.subr.bf16.mxu0 0
      %312 = vmatpush2.bf16.msra.mxu0 0
      %313 = vmatprep.mubr.bf16.mxu0 0
      %314 = vmatmul.mubr.bf16.gmra.mxu0 %v215
      %v315 = vpop.f32.mrf.mxu0
      %v316 = vadd.f32 0.0, %v315
      %v317 = vpop.f32.mrf.mxu0
      %v318 = vpop.f32.mrf.mxu0
      %v319 = vadd.f32 0.0, %v318
      %v320 = vpop.f32.mrf.mxu0
      %321 = vdwg.mxu0
      %v338 = vunpack.c.l.b16 %v199
      %v339 = vunpack.c.l.b16 %v200
      %v340 = vunpack.c.l.b16 %v201
      %v341 = vunpack.c.l.b16 %v202
      %v342 = vunpack.c.l.b16 %v203
      %v343 = vunpack.c.l.b16 %v204
      %v344 = vunpack.c.l.b16 %v205
      %v345 = vunpack.c.l.b16 %v206
      %v346 = vunpack.c.l.b16 %v207
      %v347 = vunpack.c.l.b16 %v208
      %v348 = vunpack.c.l.b16 %v209
      %v349 = vunpack.c.l.b16 %v210
      %v350 = vunpack.c.l.b16 %v211
      %v351 = vunpack.c.l.b16 %v212
      %v352 = vunpack.c.l.b16 %v213
      %v353 = vunpack.c.l.b16 %v214
      %v354 = vpack.c.b16 %v339, %v338
      %v355 = vpack.c.b16 %v341, %v340
      %v356 = vpack.c.b16 %v343, %v342
      %v357 = vpack.c.b16 %v345, %v344
      %v358 = vpack.c.b16 %v347, %v346
      %v359 = vpack.c.b16 %v349, %v348
      %v360 = vpack.c.b16 %v351, %v350
      %v361 = vpack.c.b16 %v353, %v352
      %370 = vmatprep.subr.bf16.mxu0 0
      %371 = vmatpush1.bf16.msra.mxu0 %v361
      %372 = vmatprep.subr.bf16.mxu0 0
      %373 = vmatpush1.bf16.msra.mxu0 %v360
      %374 = vmatprep.subr.bf16.mxu0 0
      %375 = vmatpush1.bf16.msra.mxu0 %v359
      %376 = vmatprep.subr.bf16.mxu0 0
      %377 = vmatpush1.bf16.msra.mxu0 %v358
      %378 = vmatprep.subr.bf16.mxu0 0
      %379 = vmatpush1.bf16.msra.mxu0 %v357
      %380 = vmatprep.subr.bf16.mxu0 0
      %381 = vmatpush1.bf16.msra.mxu0 %v356
      %382 = vmatprep.subr.bf16.mxu0 0
      %383 = vmatpush1.bf16.msra.mxu0 %v355
      %384 = vmatprep.subr.bf16.mxu0 0
      %385 = vmatpush1.bf16.msra.mxu0 %v354
      %386 = vmatprep.subr.bf16.mxu0 0
      %387 = vmatpush2.bf16.msra.mxu0 0
      %388 = vmatprep.subr.bf16.mxu0 0
      %389 = vmatpush2.bf16.msra.mxu0 0
      %390 = vmatprep.subr.bf16.mxu0 0
      %391 = vmatpush2.bf16.msra.mxu0 0
      %392 = vmatprep.subr.bf16.mxu0 0
      %393 = vmatpush2.bf16.msra.mxu0 0
      %394 = vmatprep.subr.bf16.mxu0 0
      %395 = vmatpush2.bf16.msra.mxu0 0
      %396 = vmatprep.subr.bf16.mxu0 0
      %397 = vmatpush2.bf16.msra.mxu0 0
      %398 = vmatprep.subr.bf16.mxu0 0
      %399 = vmatpush2.bf16.msra.mxu0 0
      %400 = vmatprep.subr.bf16.mxu0 0
      %401 = vmatpush2.bf16.msra.mxu0 0
      %402 = vmatprep.mubr.bf16.mxu0 0
      %403 = vmatmul.mubr.bf16.gmra.mxu0 %v198
      %v404 = vpop.f32.mrf.mxu0
      %v405 = vadd.f32 %v316, %v404
      %v406 = vpop.f32.mrf.mxu0
      %v407 = vpop.f32.mrf.mxu0
      %v408 = vadd.f32 %v319, %v407
      %v409 = vpop.f32.mrf.mxu0
      %410 = vdwg.mxu0
      %v411 = vpack.c.bf16 %v197, %v196
      %s412 = scalar_lea.vmem %s1, 128
      %v413 = vld [vmem:[%s412] sm:$0xf]
      %v414 = vld [vmem:[%s412 + $0x4] sm:$0xf]
      %v415 = vld [vmem:[%s412 + $0x8] sm:$0xf]
      %v416 = vld [vmem:[%s412 + $0xc] sm:$0xf]
      %v417 = vld [vmem:[%s412 + $0x10] sm:$0xf]
      %v418 = vld [vmem:[%s412 + $0x14] sm:$0xf]
      %v419 = vld [vmem:[%s412 + $0x18] sm:$0xf]
      %v420 = vld [vmem:[%s412 + $0x1c] sm:$0xf]
      %v421 = vld [vmem:[%s412 + $0x20] sm:$0xf]
      %v422 = vld [vmem:[%s412 + $0x24] sm:$0xf]
      %v423 = vld [vmem:[%s412 + $0x28] sm:$0xf]
      %v424 = vld [vmem:[%s412 + $0x2c] sm:$0xf]
      %v425 = vld [vmem:[%s412 + $0x30] sm:$0xf]
      %v426 = vld [vmem:[%s412 + $0x34] sm:$0xf]
      %v427 = vld [vmem:[%s412 + $0x38] sm:$0xf]
      %v428 = vld [vmem:[%s412 + $0x3c] sm:$0xf]
      %v445 = vunpack.c.l.b16 %v413
      %v446 = vunpack.c.l.b16 %v414
      %v447 = vunpack.c.l.b16 %v415
      %v448 = vunpack.c.l.b16 %v416
      %v449 = vunpack.c.l.b16 %v417
      %v450 = vunpack.c.l.b16 %v418
      %v451 = vunpack.c.l.b16 %v419
      %v452 = vunpack.c.l.b16 %v420
      %v453 = vunpack.c.l.b16 %v421
      %v454 = vunpack.c.l.b16 %v422
      %v455 = vunpack.c.l.b16 %v423
      %v456 = vunpack.c.l.b16 %v424
      %v457 = vunpack.c.l.b16 %v425
      %v458 = vunpack.c.l.b16 %v426
      %v459 = vunpack.c.l.b16 %v427
      %v460 = vunpack.c.l.b16 %v428
      %v461 = vpack.c.b16 %v446, %v445
      %v462 = vpack.c.b16 %v448, %v447
      %v463 = vpack.c.b16 %v450, %v449
      %v464 = vpack.c.b16 %v452, %v451
      %v465 = vpack.c.b16 %v454, %v453
      %v466 = vpack.c.b16 %v456, %v455
      %v467 = vpack.c.b16 %v458, %v457
      %v468 = vpack.c.b16 %v460, %v459
      %477 = vmatprep.subr.bf16.mxu0 0
      %478 = vmatpush1.bf16.msra.mxu0 %v468
      %479 = vmatprep.subr.bf16.mxu0 0
      %480 = vmatpush1.bf16.msra.mxu0 %v467
      %481 = vmatprep.subr.bf16.mxu0 0
      %482 = vmatpush1.bf16.msra.mxu0 %v466
      %483 = vmatprep.subr.bf16.mxu0 0
      %484 = vmatpush1.bf16.msra.mxu0 %v465
      %485 = vmatprep.subr.bf16.mxu0 0
      %486 = vmatpush1.bf16.msra.mxu0 %v464
      %487 = vmatprep.subr.bf16.mxu0 0
      %488 = vmatpush1.bf16.msra.mxu0 %v463
      %489 = vmatprep.subr.bf16.mxu0 0
      %490 = vmatpush1.bf16.msra.mxu0 %v462
      %491 = vmatprep.subr.bf16.mxu0 0
      %492 = vmatpush1.bf16.msra.mxu0 %v461
      %493 = vmatprep.subr.bf16.mxu0 0
      %494 = vmatpush2.bf16.msra.mxu0 0
      %495 = vmatprep.subr.bf16.mxu0 0
      %496 = vmatpush2.bf16.msra.mxu0 0
      %497 = vmatprep.subr.bf16.mxu0 0
      %498 = vmatpush2.bf16.msra.mxu0 0
      %499 = vmatprep.subr.bf16.mxu0 0
      %500 = vmatpush2.bf16.msra.mxu0 0
      %501 = vmatprep.subr.bf16.mxu0 0
      %502 = vmatpush2.bf16.msra.mxu0 0
      %503 = vmatprep.subr.bf16.mxu0 0
      %504 = vmatpush2.bf16.msra.mxu0 0
      %505 = vmatprep.subr.bf16.mxu0 0
      %506 = vmatpush2.bf16.msra.mxu0 0
      %507 = vmatprep.subr.bf16.mxu0 0
      %508 = vmatpush2.bf16.msra.mxu0 0
      %509 = vmatprep.mubr.bf16.mxu0 0
      %510 = vmatmul.mubr.bf16.gmra.mxu0 %v411
      %v511 = vpop.f32.mrf.mxu0
      %v512 = vadd.f32 0.0, %v511
      %v513 = vpop.f32.mrf.mxu0
      %v514 = vpop.f32.mrf.mxu0
      %v515 = vadd.f32 0.0, %v514
      %v516 = vpop.f32.mrf.mxu0
      %517 = vdwg.mxu0
      %v518 = vadd.f32 %v405, %v512
      %v519 = vadd.f32 %v408, %v515
      %520 = vst [vmem:[%s168] sm:$0xff] %v518
      %521 = vst [vmem:[%s168 + $0x8] sm:$0xff] %v519
      %v522 = vld [vmem:[%s3] sm:$0x3]
      %v523 = vadd.f32 %v518, %v519
      %v524 = vrot.slane %v523, 4
      %v525 = vadd.f32 %v523, %v524
      %v526 = vrot.slane %v525, 2
      %v527 = vadd.f32 %v525, %v526
      %v528 = vrot.slane %v527, 1
      %v529 = vadd.f32 %v527, %v528
      %v530 = vmul.f32 %v518, %v518
      %v531 = vmul.f32 %v519, %v519
      %v532 = vadd.f32 %v530, %v531
      %v533 = vrot.slane %v532, 4
      %v534 = vadd.f32 %v532, %v533
      %v535 = vrot.slane %v534, 2
      %v536 = vadd.f32 %v534, %v535
      %v537 = vrot.slane %v536, 1
      %v538 = vadd.f32 %v536, %v537
      %vm539 = vcmask 1040384
      %v540 = vsel %vm539, %v529, %v538
      %v541 = vadd.f32 %v522, %v540
      %542 = vst [vmem:[%s3] sm:$0x3] %v541
      %p543 = scmp.lt.s32.totalorder %s15, 1
      %s544 = scalar_select %p543, %s15, 1
      %s545 = smul.addr %s544, 2
      %s546 = smul.addr %s545, 8
      %s547 = scalar_lea.vmem %s2, %s546
      // Predicated region
      $region33: #{residual_block.3} parent=27 // pred_check
        %p548 = pneg %p80
      $region34: #{residual_block.3} parent=27 // pred_check_branch
        %550 = sbr.rel (%p548) target = $region36
      $region35: #{residual_block.3} parent=27 // pred_region
        _
      $region36: #{residual_block.3} parent=27 // pred_fallthru
        _
      // Predicated region
      $region37: #{residual_block.3} parent=27 // pred_check
        %p551 = pneg %p101
      $region38: #{residual_block.3} parent=27 // pred_check_branch
        %553 = sbr.rel (%p551) target = $region40
      $region39: #{residual_block.3} parent=27 // pred_region
        _
      $region40: #{residual_block.3} parent=27 // pred_fallthru
        _
      // Predicated region
      $region41: #{residual_block.3} parent=27 // pred_check
        %p554 = pneg %p101
      $region42: #{residual_block.3} parent=27 // pred_check_branch
        %556 = sbr.rel (%p554) target = $region44
      $region43: #{residual_block.3} parent=27 // pred_region
        _
      $region44: #{residual_block.3} parent=27 // pred_fallthru
        _
    $region28: #{residual_block.3} parent=5 // pred_fallthru
      _
    %p557 = scmp.le.s32.totalorder 2, %s10
    // Predicated region
    $region45: #{residual_block.3} parent=5 // pred_check
      %p558 = pneg %p557
    $region46: #{residual_block.3} parent=5 // pred_check_branch
      %560 = sbr.rel (%p558) target = $region48
    $region47: #{residual_block.3} parent=5 // pred_region
      %s561 = ssub.s32 %s10, 2
      // Predicated region
      $region49: #{residual_block.3} parent=47 // pred_check
        %p562 = pneg %p86
      $region50: #{residual_block.3} parent=47 // pred_check_branch
        %564 = sbr.rel (%p562) target = $region52
      $region51: #{residual_block.3} parent=47 // pred_region
        %p565 = scmp.lt.s32.totalorder %s16, 1
        %s566 = scalar_select %p565, %s16, 1
        %s567 = smul.addr %s566, 2
        %s568 = smul.addr %s567, 8
        %s569 = scalar_lea.vmem %s2, %s568
      $region52: #{residual_block.3} parent=47 // pred_fallthru
        _
    $region48: #{residual_block.3} parent=5 // pred_fallthru
      _
  $region6: #{residual_block.3} parent=0 // loop_footer
    %s14 = sadd.s32 1, %s10
  $region7: #{residual_block.3} parent=0 // loop_footer_branch
    %9 = sbr.rel target = $region3
  $region8: #{residual_block.3} parent=0 // loop_exit
    _

// kernel: residual_block.5
$region0: #{residual_block.5}
  #allocation0 [shape = 'u32[]', space=smem, size = 0x4, offset = 0x4, fixed_abs, tag = 'smem constant byte address 0x4 - core index']
  #allocation1 [shape = 'u32[144,128]{1,0:T(1,128)}', space=vmem, size = 0x12000, scoped, tag = 'internal scratch']
  %s0 = inlined_call_operand.vmem [shape: f32[2,16,128], index: 0, kind: input, shape index: {}]
  %s1 = inlined_call_operand.vmem [shape: f32[2,16,128], index: 1, kind: input, shape index: {}]
  %s2 = inlined_call_operand.vmem [shape: f32[2,128], index: 2, kind: input, shape index: {}]
  %s3 = inlined_call_operand.vmem [shape: f32[2,16,128], index: 3, kind: output, shape index: {}]
  %s4 = sld [smem:[#allocation0]]
  $region45: #{residual_block.5} parent=0
    _
  %s6 = ssub.s32 1, %s4
  %s7 = scalar_select 0, %s6, %s4
  loop: start=0, step=1, limit=4
  $region2: #{residual_block.5} parent=0 // loop_pre_header
    _
  $region3: #{residual_block.5} parent=0 // loop_header
    %s9 = sphi 0, %s13
    %p10 = scmp.ge.s32.totalorder %s9, 4
    %s19 = sphi 0, %s21
    %s22 = sphi 0, %s19
    %s23 = sphi 0, %s22
    %s39 = sphi 0, %s23
    %s45 = sphi 0, %s47
    %s48 = sphi 0, %s45
    %s49 = sphi 0, %s48
    %s65 = sphi 0, %s49
    %s69 = sphi 0, %s69
    %s71 = sphi 0, %s69
    %s72 = sphi 0, %s71
    %s86 = sphi 0, %s72
    %s92 = sphi 0, %s94
    %s95 = sphi 0, %s92
    %s96 = sphi 0, %s95
    %s112 = sphi 0, %s96
  $region4: #{residual_block.5} parent=0 // loop_header_branch
    %12 = sbr.rel (%p10) target = $region8
  $region5: #{residual_block.5} parent=0 // loop_body
    %s14 = ssub.s32 %s9, 1
    %s15 = ssub.s32 %s9, 2
    %s16 = sadd.s32 %s9, 1
    %s17 = ssub.s32 %s9, %s16
    %p18 = scmp.eq.s32.totalorder %s17, 0
    %s20 = sadd.s32 %s19, 1
    %s21 = scalar_select %p18, %s19, %s20
    %p24 = pneg %p18
    %p25 = scmp.eq.s32.totalorder %s9, 1
    %p26 = por %p24, %p25
    %p27 = scmp.ne.s32.totalorder %s19, %s22
    %p28 = scmp.eq.s32.totalorder %s9, 0
    %p29 = por %p27, %p28
    %p30 = scmp.ne.s32.totalorder %s19, %s22
    %p31 = scmp.eq.s32.totalorder %s14, 1
    %p32 = por %p30, %p31
    %p33 = scmp.ne.s32.totalorder %s22, %s23
    %p34 = scmp.eq.s32.totalorder %s14, 0
    %p35 = por %p33, %p34
    %p36 = scmp.ne.s32.totalorder %s22, %s23
    %p37 = scmp.eq.s32.totalorder %s15, 1
    %p38 = por %p36, %p37
    %p40 = scmp.ne.s32.totalorder %s23, %s39
    %p41 = scmp.eq.s32.totalorder %s15, 0
    %p42 = por %p40, %p41
    %s43 = ssub.s32 %s9, %s16
    %p44 = scmp.eq.s32.totalorder %s43, 0
    %s46 = sadd.s32 %s45, 1
    %s47 = scalar_select %p44, %s45, %s46
    %p50 = pneg %p44
    %p51 = scmp.eq.s32.totalorder %s9, 1
    %p52 = por %p50, %p51
    %p53 = scmp.ne.s32.totalorder %s45, %s48
    %p54 = scmp.eq.s32.totalorder %s9, 0
    %p55 = por %p53, %p54
    %p56 = scmp.ne.s32.totalorder %s45, %s48
    %p57 = scmp.eq.s32.totalorder %s14, 1
    %p58 = por %p56, %p57
    %p59 = scmp.ne.s32.totalorder %s48, %s49
    %p60 = scmp.eq.s32.totalorder %s14, 0
    %p61 = por %p59, %p60
    %p62 = scmp.ne.s32.totalorder %s48, %s49
    %p63 = scmp.eq.s32.totalorder %s15, 1
    %p64 = por %p62, %p63
    %p66 = scmp.ne.s32.totalorder %s49, %s65
    %p67 = scmp.eq.s32.totalorder %s15, 0
    %p68 = por %p66, %p67
    %s70 = sadd.s32 %s69, 1
    %p73 = scmp.eq.s32.totalorder %s9, 1
    %p74 = scmp.ne.s32.totalorder %s69, %s71
    %p75 = scmp.eq.s32.totalorder %s9, 0
    %p76 = por %p74, %p75
    %p77 = scmp.ne.s32.totalorder %s69, %s71
    %p78 = scmp.eq.s32.totalorder %s14, 1
    %p79 = por %p77, %p78
    %p80 = scmp.ne.s32.totalorder %s71, %s72
    %p81 = scmp.eq.s32.totalorder %s14, 0
    %p82 = por %p80, %p81
    %p83 = scmp.ne.s32.totalorder %s71, %s72
    %p84 = scmp.eq.s32.totalorder %s15, 1
    %p85 = por %p83, %p84
    %p87 = scmp.ne.s32.totalorder %s72, %s86
    %p88 = scmp.eq.s32.totalorder %s15, 0
    %p89 = por %p87, %p88
    %s90 = ssub.s32 %s9, %s16
    %p91 = scmp.eq.s32.totalorder %s90, 0
    %s93 = sadd.s32 %s92, 1
    %s94 = scalar_select %p91, %s92, %s93
    %p97 = pneg %p91
    %p98 = scmp.eq.s32.totalorder %s9, 1
    %p99 = por %p97, %p98
    %p100 = scmp.ne.s32.totalorder %s92, %s95
    %p101 = scmp.eq.s32.totalorder %s9, 0
    %p102 = por %p100, %p101
    %p103 = scmp.ne.s32.totalorder %s92, %s95
    %p104 = scmp.eq.s32.totalorder %s14, 1
    %p105 = por %p103, %p104
    %p106 = scmp.ne.s32.totalorder %s95, %s96
    %p107 = scmp.eq.s32.totalorder %s14, 0
    %p108 = por %p106, %p107
    %p109 = scmp.ne.s32.totalorder %s95, %s96
    %p110 = scmp.eq.s32.totalorder %s15, 1
    %p111 = por %p109, %p110
    %p113 = scmp.ne.s32.totalorder %s96, %s112
    %p114 = scmp.eq.s32.totalorder %s15, 0
    %p115 = por %p113, %p114
    %p116 = scmp.le.s32.totalorder 1, %s9
    %p117 = scmp.lt.s32.totalorder %s9, 3
    %p118 = pnand %p116, %p117
    %p119 = pneg %p118
    // Predicated region
    $region9: #{residual_block.5} parent=5 // pred_check
      _
    $region10: #{residual_block.5} parent=5 // pred_check_branch
      %121 = sbr.rel (%p118) target = $region12
    $region11: #{residual_block.5} parent=5 // pred_region
      %s122 = ssub.s32 %s9, 1
      // Predicated region
      $region13: #{residual_block.5} parent=11 // pred_check
        %p123 = pneg %p82
      $region14: #{residual_block.5} parent=11 // pred_check_branch
        %125 = sbr.rel (%p123) target = $region16
      $region15: #{residual_block.5} parent=11 // pred_region
        _
      $region16: #{residual_block.5} parent=11 // pred_fallthru
        _
    $region12: #{residual_block.5} parent=5 // pred_fallthru
      _
    %p126 = scmp.lt.s32.totalorder %s9, 2
    // Predicated region
    $region17: #{residual_block.5} parent=5 // pred_check
      %p127 = pneg %p126
    $region18: #{residual_block.5} parent=5 // pred_check_branch
      %129 = sbr.rel (%p127) target = $region20
    $region19: #{residual_block.5} parent=5 // pred_region
      // Predicated region
      $region21: #{residual_block.5} parent=19 // pred_check
        %p130 = pneg %p29
      $region22: #{residual_block.5} parent=19 // pred_check_branch
        %132 = sbr.rel (%p130) target = $region24
      $region23: #{residual_block.5} parent=19 // pred_region
        %p133 = scmp.lt.s32.totalorder %s9, 1
        %s134 = scalar_select %p133, %s9, 1
        %s135 = smul.addr %s134, 2
        %s136 = smul.addr %s135, 8
        %s137 = scalar_lea.vmem %s0, %s136
      $region24: #{residual_block.5} parent=19 // pred_fallthru
        _
      // Predicated region
      $region25: #{residual_block.5} parent=19 // pred_check
        %p138 = pneg %p55
      $region26: #{residual_block.5} parent=19 // pred_check_branch
        %140 = sbr.rel (%p138) target = $region28
      $region27: #{residual_block.5} parent=19 // pred_region
        %p141 = scmp.lt.s32.totalorder %s9, 1
        %s142 = scalar_select %p141, %s9, 1
        %s143 = smul.addr %s142, 2
        %s144 = smul.addr %s143, 8
        %s145 = scalar_lea.vmem %s1, %s144
      $region28: #{residual_block.5} parent=19 // pred_fallthru
        _
    $region20: #{residual_block.5} parent=5 // pred_fallthru
      _
    %p146 = scmp.le.s32.totalorder 1, %s9
    %p147 = scmp.lt.s32.totalorder %s9, 3
    %p148 = pnand %p146, %p147
    %p149 = pneg %p148
    // Predicated region
    $region29: #{residual_block.5} parent=5 // pred_check
      _
    $region30: #{residual_block.5} parent=5 // pred_check_branch
      %151 = sbr.rel (%p148) target = $region32
    $region31: #{residual_block.5} parent=5 // pred_region
      %s152 = ssub.s32 %s9, 1
      %p153 = scmp.lt.s32.totalorder %s14, 1
      %s154 = scalar_select %p153, %s14, 1
      %s155 = smul.addr %s154, 2
      %s156 = smul.addr %s155, 8
      %s157 = scalar_lea.vmem %s0, %s156
      %p158 = pneg %p35
      %p159 = pneg %p32
      %p160 = scmp.lt.s32.totalorder %s14, 1
      %s161 = scalar_select %p160, %s14, 1
      %s162 = smul.addr %s161, 2
      %s163 = smul.addr %s162, 8
      %s164 = scalar_lea.vmem %s1, %s163
      %p165 = pneg %p61
      %p166 = pneg %p58
      %p167 = pneg %p82
      %p168 = pneg %p79
      %p169 = pneg %p108
      %p170 = pneg %p105
      %p171 = scmp.lt.s32.totalorder %s14, 1
      %s172 = scalar_select %p171, %s14, 1
      %s173 = smul.addr %s172, 2
      %s174 = smul.addr %s173, 8
      %s175 = scalar_lea.vmem %s3, %s174
      %p176 = scmp.lt.s32.totalorder %s14, 1
      %s177 = scalar_select %p176, %s14, 1
      %s178 = smul.addr %s177, 2
      %s179 = smul.addr %s178, 8
      %s180 = scalar_lea.vmem %s0, %s179
      %p181 = scmp.lt.s32.totalorder %s14, 1
      %s182 = scalar_select %p181, %s14, 1
      %s183 = smul.addr %s182, 2
      %s184 = smul.addr %s183, 8
      %s185 = scalar_lea.vmem %s1, %s184
      %p186 = scmp.lt.s32.totalorder %s14, 1
      %s187 = scalar_select %p186, %s14, 1
      %s188 = smul.addr %s187, 2
      %s189 = smul.addr %s188, 8
      %s190 = scalar_lea.vmem %s3, %s189
      %v191 = vld [vmem:[%s180] sm:$0xff]
      %v192 = vld [vmem:[%s180 + $0x8] sm:$0xff]
      %v193 = vld [vmem:[%s2] sm:$0x1]
      %v194 = vlaneseq
      %v195 = vshrl.u32 %v194, 7
      %v196 = vsub.s32 0, %v195
      %v197 = vrot.slane %v193, %v196
      %v198 = vmul.f32 %v191, %v197
      %v199 = vmul.f32 %v192, %v197
      %v200 = vld [vmem:[%s2 + $0x1] sm:$0x1]
      %v201 = vlaneseq
      %v202 = vshrl.u32 %v201, 7
      %v203 = vsub.s32 0, %v202
      %v204 = vrot.slane %v200, %v203
      %v205 = vadd.f32 %v198, %v204
      %v206 = vadd.f32 %v199, %v204
      %v207 = vld [vmem:[%s185] sm:$0xff]
      %v208 = vld [vmem:[%s185 + $0x8] sm:$0xff]
      %v209 = vadd.f32 %v205, %v207
      %v210 = vadd.f32 %v206, %v208
      %v211 = vmax.f32 %v209, 0.0
      %v212 = vmax.f32 %v210, 0.0
      %213 = vst [vmem:[%s190] sm:$0xff] %v211
      %214 = vst [vmem:[%s190 + $0x8] sm:$0xff] %v212
      %p215 = scmp.lt.s32.totalorder %s14, 1
      %s216 = scalar_select %p215, %s14, 1
      %s217 = smul.addr %s216, 2
      %s218 = smul.addr %s217, 8
      %s219 = scalar_lea.vmem %s3, %s218
      // Predicated region
      $region33: #{residual_block.5} parent=31 // pred_check
        %p220 = pneg %p105
      $region34: #{residual_block.5} parent=31 // pred_check_branch
        %222 = sbr.rel (%p220) target = $region36
      $region35: #{residual_block.5} parent=31 // pred_region
        _
      $region36: #{residual_block.5} parent=31 // pred_fallthru
        _
    $region32: #{residual_block.5} parent=5 // pred_fallthru
      _
    %p223 = scmp.le.s32.totalorder 2, %s9
    // Predicated region
    $region37: #{residual_block.5} parent=5 // pred_check
      %p224 = pneg %p223
    $region38: #{residual_block.5} parent=5 // pred_check_branch
      %226 = sbr.rel (%p224) target = $region40
    $region39: #{residual_block.5} parent=5 // pred_region
      %s227 = ssub.s32 %s9, 2
      // Predicated region
      $region41: #{residual_block.5} parent=39 // pred_check
        %p228 = pneg %p111
      $region42: #{residual_block.5} parent=39 // pred_check_branch
        %230 = sbr.rel (%p228) target = $region44
      $region43: #{residual_block.5} parent=39 // pred_region
        %p231 = scmp.lt.s32.totalorder %s15, 1
        %s232 = scalar_select %p231, %s15, 1
        %s233 = smul.addr %s232, 2
        %s234 = smul.addr %s233, 8
        %s235 = scalar_lea.vmem %s3, %s234
      $region44: #{residual_block.5} parent=39 // pred_fallthru
        _
    $region40: #{residual_block.5} parent=5 // pred_fallthru
      _
  $region6: #{residual_block.5} parent=0 // loop_footer
    %s13 = sadd.s32 1, %s9
  $region7: #{residual_block.5} parent=0 // loop_footer_branch
    %8 = sbr.rel target = $region3
  $region8: #{residual_block.5} parent=0 // loop_exit
    _

// kernel: residual_block.4
$region0: #{residual_block.4}
  #allocation0 [shape = 'u32[]', space=smem, size = 0x4, offset = 0x4, fixed_abs, tag = 'smem constant byte address 0x4 - core index']
  #allocation1 [shape = 'u32[144,128]{1,0:T(1,128)}', space=vmem, size = 0x12000, scoped, tag = 'internal scratch']
  %s0 = inlined_call_operand.vmem [shape: f32[2,16,128], index: 0, kind: input, shape index: {}]
  %s1 = inlined_call_operand.vmem [shape: f32[2,128], index: 1, kind: input, shape index: {}]
  %s2 = inlined_call_operand.vmem [shape: bf16[3,128,128], index: 2, kind: input, shape index: {}]
  %s3 = inlined_call_operand.vmem [shape: f32[2,16,128], index: 3, kind: output, shape index: {0}]
  %s4 = inlined_call_operand.vmem [shape: f32[2,128], index: 4, kind: output, shape index: {1}]
  %5 = xla_tuple %s3, %s4
  %s6 = sld [smem:[#allocation0]]
  $region57: #{residual_block.4} parent=0
    _
  %s8 = ssub.s32 1, %s6
  %s9 = scalar_select 0, %s8, %s6
  loop: start=0, step=1, limit=4
  $region2: #{residual_block.4} parent=0 // loop_pre_header
    _
  $region3: #{residual_block.4} parent=0 // loop_header
    %s11 = sphi 0, %s15
    %p12 = scmp.ge.s32.totalorder %s11, 4
    %s21 = sphi 0, %s23
    %s24 = sphi 0, %s21
    %s25 = sphi 0, %s24
    %s41 = sphi 0, %s25
    %s45 = sphi 0, %s45
    %s47 = sphi 0, %s45
    %s48 = sphi 0, %s47
    %s62 = sphi 0, %s48
    %s66 = sphi 0, %s66
    %s68 = sphi 0, %s66
    %s69 = sphi 0, %s68
    %s83 = sphi 0, %s69
    %s89 = sphi 0, %s91
    %s92 = sphi 0, %s89
    %s93 = sphi 0, %s92
    %s109 = sphi 0, %s93
    %s113 = sphi 0, %s113
    %s115 = sphi 0, %s113
    %s116 = sphi 0, %s115
    %s130 = sphi 0, %s116
  $region4: #{residual_block.4} parent=0 // loop_header_branch
    %14 = sbr.rel (%p12) target = $region8
  $region5: #{residual_block.4} parent=0 // loop_body
    %s16 = ssub.s32 %s11, 1
    %s17 = ssub.s32 %s11, 2
    %s18 = sadd.s32 %s11, 1
    %s19 = ssub.s32 %s11, %s18
    %p20 = scmp.eq.s32.totalorder %s19, 0
    %s22 = sadd.s32 %s21, 1
    %s23 = scalar_select %p20, %s21, %s22
    %p26 = pneg %p20
    %p27 = scmp.eq.s32.totalorder %s11, 1
    %p28 = por %p26, %p27
    %p29 = scmp.ne.s32.totalorder %s21, %s24
    %p30 = scmp.eq.s32.totalorder %s11, 0
    %p31 = por %p29, %p30
    %p32 = scmp.ne.s32.totalorder %s21, %s24
    %p33 = scmp.eq.s32.totalorder %s16, 1
    %p34 = por %p32, %p33
    %p35 = scmp.ne.s32.totalorder %s24, %s25
    %p36 = scmp.eq.s32.totalorder %s16, 0
    %p37 = por %p35, %p36
    %p38 = scmp.ne.s32.totalorder %s24, %s25
    %p39 = scmp.eq.s32.totalorder %s17, 1
    %p40 = por %p38, %p39
    %p42 = scmp.ne.s32.totalorder %s25, %s41
    %p43 = scmp.eq.s32.totalorder %s17, 0
    %p44 = por %p42, %p43
    %s46 = sadd.s32 %s45, 1
    %p49 = scmp.eq.s32.totalorder %s11, 1
    %p50 = scmp.ne.s32.totalorder %s45, %s47
    %p51 = scmp.eq.s32.totalorder %s11, 0
    %p52 = por %p50, %p51
    %p53 = scmp.ne.s32.totalorder %s45, %s47
    %p54 = scmp.eq.s32.totalorder %s16, 1
    %p55 = por %p53, %p54
    %p56 = scmp.ne.s32.totalorder %s47, %s48
    %p57 = scmp.eq.s32.totalorder %s16, 0
    %p58 = por %p56, %p57
    %p59 = scmp.ne.s32.totalorder %s47, %s48
    %p60 = scmp.eq.s32.totalorder %s17, 1
    %p61 = por %p59, %p60
    %p63 = scmp.ne.s32.totalorder %s48, %s62
    %p64 = scmp.eq.s32.totalorder %s17, 0
    %p65 = por %p63, %p64
    %s67 = sadd.s32 %s66, 1
    %p70 = scmp.eq.s32.totalorder %s11, 1
    %p71 = scmp.ne.s32.totalorder %s66, %s68
    %p72 = scmp.eq.s32.totalorder %s11, 0
    %p73 = por %p71, %p72
    %p74 = scmp.ne.s32.totalorder %s66, %s68
    %p75 = scmp.eq.s32.totalorder %s16, 1
    %p76 = por %p74, %p75
    %p77 = scmp.ne.s32.totalorder %s68, %s69
    %p78 = scmp.eq.s32.totalorder %s16, 0
    %p79 = por %p77, %p78
    %p80 = scmp.ne.s32.totalorder %s68, %s69
    %p81 = scmp.eq.s32.totalorder %s17, 1
    %p82 = por %p80, %p81
    %p84 = scmp.ne.s32.totalorder %s69, %s83
    %p85 = scmp.eq.s32.totalorder %s17, 0
    %p86 = por %p84, %p85
    %s87 = ssub.s32 %s11, %s18
    %p88 = scmp.eq.s32.totalorder %s87, 0
    %s90 = sadd.s32 %s89, 1
    %s91 = scalar_select %p88, %s89, %s90
    %p94 = pneg %p88
    %p95 = scmp.eq.s32.totalorder %s11, 1
    %p96 = por %p94, %p95
    %p97 = scmp.ne.s32.totalorder %s89, %s92
    %p98 = scmp.eq.s32.totalorder %s11, 0
    %p99 = por %p97, %p98
    %p100 = scmp.ne.s32.totalorder %s89, %s92
    %p101 = scmp.eq.s32.totalorder %s16, 1
    %p102 = por %p100, %p101
    %p103 = scmp.ne.s32.totalorder %s92, %s93
    %p104 = scmp.eq.s32.totalorder %s16, 0
    %p105 = por %p103, %p104
    %p106 = scmp.ne.s32.totalorder %s92, %s93
    %p107 = scmp.eq.s32.totalorder %s17, 1
    %p108 = por %p106, %p107
    %p110 = scmp.ne.s32.totalorder %s93, %s109
    %p111 = scmp.eq.s32.totalorder %s17, 0
    %p112 = por %p110, %p111
    %s114 = sadd.s32 %s113, 1
    %p117 = scmp.eq.s32.totalorder %s11, 1
    %p118 = scmp.ne.s32.totalorder %s113, %s115
    %p119 = scmp.eq.s32.totalorder %s11, 0
    %p120 = por %p118, %p119
    %p121 = scmp.ne.s32.totalorder %s113, %s115
    %p122 = scmp.eq.s32.totalorder %s16, 1
    %p123 = por %p121, %p122
    %p124 = scmp.ne.s32.totalorder %s115, %s116
    %p125 = scmp.eq.s32.totalorder %s16, 0
    %p126 = por %p124, %p125
    %p127 = scmp.ne.s32.totalorder %s115, %s116
    %p128 = scmp.eq.s32.totalorder %s17, 1
    %p129 = por %p127, %p128
    %p131 = scmp.ne.s32.totalorder %s116, %s130
    %p132 = scmp.eq.s32.totalorder %s17, 0
    %p133 = por %p131, %p132
    %p134 = scmp.le.s32.totalorder 1, %s11
    %p135 = scmp.lt.s32.totalorder %s11, 3
    %p136 = pnand %p134, %p135
    %p137 = pneg %p136
    // Predicated region
    $region9: #{residual_block.4} parent=5 // pred_check
      _
    $region10: #{residual_block.4} parent=5 // pred_check_branch
      %139 = sbr.rel (%p136) target = $region12
    $region11: #{residual_block.4} parent=5 // pred_region
      %s140 = ssub.s32 %s11, 1
      // Predicated region
      $region13: #{residual_block.4} parent=11 // pred_check
        %p141 = pneg %p58
      $region14: #{residual_block.4} parent=11 // pred_check_branch
        %143 = sbr.rel (%p141) target = $region16
      $region15: #{residual_block.4} parent=11 // pred_region
        _
      $region16: #{residual_block.4} parent=11 // pred_fallthru
        _
      // Predicated region
      $region17: #{residual_block.4} parent=11 // pred_check
        %p144 = pneg %p79
      $region18: #{residual_block.4} parent=11 // pred_check_branch
        %146 = sbr.rel (%p144) target = $region20
      $region19: #{residual_block.4} parent=11 // pred_region
        _
      $region20: #{residual_block.4} parent=11 // pred_fallthru
        _
    $region12: #{residual_block.4} parent=5 // pred_fallthru
      _
    %p147 = scmp.lt.s32.totalorder %s11, 2
    // Predicated region
    $region21: #{residual_block.4} parent=5 // pred_check
      %p148 = pneg %p147
    $region22: #{residual_block.4} parent=5 // pred_check_branch
      %150 = sbr.rel (%p148) target = $region24
    $region23: #{residual_block.4} parent=5 // pred_region
      // Predicated region
      $region25: #{residual_block.4} parent=23 // pred_check
        %p151 = pneg %p31
      $region26: #{residual_block.4} parent=23 // pred_check_branch
        %153 = sbr.rel (%p151) target = $region28
      $region27: #{residual_block.4} parent=23 // pred_region
        %p154 = scmp.lt.s32.totalorder %s11, 1
        %s155 = scalar_select %p154, %s11, 1
        %s156 = smul.addr %s155, 2
        %s157 = smul.addr %s156, 8
        %s158 = scalar_lea.vmem %s0, %s157
      $region28: #{residual_block.4} parent=23 // pred_fallthru
        _
    $region24: #{residual_block.4} parent=5 // pred_fallthru
      _
    %p159 = scmp.le.s32.totalorder 1, %s11
    %p160 = scmp.lt.s32.totalorder %s11, 3
    %p161 = pnand %p159, %p160
    %p162 = pneg %p161
    // Predicated region
    $region29: #{residual_block.4} parent=5 // pred_check
      _
    $region30: #{residual_block.4} parent=5 // pred_check_branch
      %164 = sbr.rel (%p161) target = $region32
    $region31: #{residual_block.4} parent=5 // pred_region
      %s165 = ssub.s32 %s11, 1
      %p166 = scmp.lt.s32.totalorder %s16, 1
      %s167 = scalar_select %p166, %s16, 1
      %s168 = smul.addr %s167, 2
      %s169 = smul.addr %s168, 8
      %s170 = scalar_lea.vmem %s0, %s169
      %p171 = pneg %p37
      %p172 = pneg %p34
      %p173 = pneg %p58
      %p174 = pneg %p55
      %p175 = pneg %p79
      %p176 = pneg %p76
      %p177 = pneg %p105
      %p178 = pneg %p102
      %p179 = scmp.lt.s32.totalorder %s16, 1
      %s180 = scalar_select %p179, %s16, 1
      %s181 = smul.addr %s180, 2
      %s182 = smul.addr %s181, 8
      %s183 = scalar_lea.vmem %s3, %s182
      %p184 = pneg %p126
      %p185 = pneg %p123
      %p186 = scmp.lt.s32.totalorder %s16, 1
      %s187 = scalar_select %p186, %s16, 1
      %s188 = smul.addr %s187, 2
      %s189 = smul.addr %s188, 8
      %s190 = scalar_lea.vmem %s0, %s189
      %p191 = scmp.lt.s32.totalorder %s16, 1
      %s192 = scalar_select %p191, %s16, 1
      %s193 = smul.addr %s192, 2
      %s194 = smul.addr %s193, 8
      %s195 = scalar_lea.vmem %s3, %s194
      %p197 = scmp.eq.s32.totalorder %s16, 0
      // Predicated region
      $region33: #{residual_block.4} parent=31 // pred_check
        %p198 = pneg %p197
      $region34: #{residual_block.4} parent=31 // pred_check_branch
        %200 = sbr.rel (%p198) target = $region36
      $region35: #{residual_block.4} parent=31 // pred_region
        %201 = vst [vmem:[%s4] sm:$0x3] 0.0
      $region36: #{residual_block.4} parent=31 // pred_fallthru
        _
      %v202 = vld [vmem:[%s190] sm:$0xff]
      %v203 = vld [vmem:[%s190 + $0x8] sm:$0xff]
      %v204 = vld [vmem:[%s1] sm:$0x1]
      %v205 = vlaneseq
      %v206 = vshrl.u32 %v205, 7
      %v207 = vsub.s32 0, %v206
      %v208 = vrot.slane %v204, %v207
      %v209 = vmul.f32 %v202, %v208
      %v210 = vmul.f32 %v203, %v208
      %v211 = vld [vmem:[%s1 + $0x1] sm:$0x1]
      %v212 = vlaneseq
      %v213 = vshrl.u32 %v212, 7
      %v214 = vsub.s32 0, %v213
      %v215 = vrot.slane %v211, %v214
      %v216 = vadd.f32 %v209, %v215
      %v217 = vadd.f32 %v210, %v215
      %v218 = vmax.f32 %v216, 0.0
      %v219 = vmax.f32 %v217, 0.0
      %v220 = vlaneseq
      %v221 = vshrl.u32 %v220, 7
      %v222 = vadd.s32 %v221, 8
      %vm223 = vcmp.eq.s32.totalorder %v221, 0
      %vm224 = vcmp.eq.s32.totalorder %v222, 0
      %v225 = vrot.slane %v218, 7
      %v226 = vrot.slane %v219, 7
      %vm227 = vcmp.lt.s32.totalorder %v221, 1
      %v228 = vsel %vm227, %v225, %v226
      %v229 = vsel %vm227, %v226, %v225
      %v230 = vsel %vm223, 0.0, %v229
      %v231 = vsel %vm224, 0.0, %v228
      %vm232 = vcmp.eq.s32.totalorder %v221, 15
      %vm233 = vcmp.eq.s32.totalorder %v222, 15
      %v234 = vrot.slane %v218, 1
      %v235 = vrot.slane %v219, 1
      %vm236 = vcmp.lt.s32.totalorder %v221, 7
      %v237 = vsel %vm236, %v234, %v235
      %v238 = vsel %vm236, %v235, %v234
      %v239 = vsel %vm232, 0.0, %v237
      %v240 = vsel %vm233, 0.0, %v238
      %v241 = vpack.c.bf16 %v231, %v230
      %v242 = vld [vmem:[%s2] sm:$0xf]
      %v243 = vld [vmem:[%s2 + $0x4] sm:$0xf]
      %v244 = vld [vmem:[%s2 + $0x8] sm:$0xf]
      %v245 = vld [vmem:[%s2 + $0xc] sm:$0xf]
      %v246 = vld [vmem:[%s2 + $0x10] sm:$0xf]
      %v247 = vld [vmem:[%s2 + $0x14] sm:$0xf]
      %v248 = vld [vmem:[%s2 + $0x18] sm:$0xf]
      %v249 = vld [vmem:[%s2 + $0x1c] sm:$0xf]
      %v250 = vld [vmem:[%s2 + $0x20] sm:$0xf]
      %v251 = vld [vmem:[%s2 + $0x24] sm:$0xf]
      %v252 = vld [vmem:[%s2 + $0x28] sm:$0xf]
      %v253 = vld [vmem:[%s2 + $0x2c] sm:$0xf]
      %v254 = vld [vmem:[%s2 + $0x30] sm:$0xf]
      %v255 = vld [vmem:[%s2 + $0x34] sm:$0xf]
      %v256 = vld [vmem:[%s2 + $0x38] sm:$0xf]
      %v257 = vld [vmem:[%s2 + $0x3c] sm:$0xf]
      %v258 = vpack.c.bf16 %v219, %v218
      %s259 = scalar_lea.vmem %s2, 64
      %v260 = vld [vmem:[%s259] sm:$0xf]
      %v261 = vld [vmem:[%s259 + $0x4] sm:$0xf]
      %v262 = vld [vmem:[%s259 + $0x8] sm:$0xf]
      %v263 = vld [vmem:[%s259 + $0xc] sm:$0xf]
      %v264 = vld [vmem:[%s259 + $0x10] sm:$0xf]
      %v265 = vld [vmem:[%s259 + $0x14] sm:$0xf]
      %v266 = vld [vmem:[%s259 + $0x18] sm:$0xf]
      %v267 = vld [vmem:[%s259 + $0x1c] sm:$0xf]
      %v268 = vld [vmem:[%s259 + $0x20] sm:$0xf]
      %v269 = vld [vmem:[%s259 + $0x24] sm:$0xf]
      %v270 = vld [vmem:[%s259 + $0x28] sm:$0xf]
      %v271 = vld [vmem:[%s259 + $0x2c] sm:$0xf]
      %v272 = vld [vmem:[%s259 + $0x30] sm:$0xf]
      %v273 = vld [vmem:[%s259 + $0x34] sm:$0xf]
      %v274 = vld [vmem:[%s259 + $0x38] sm:$0xf]
      %v275 = vld [vmem:[%s259 + $0x3c] sm:$0xf]
      %v292 = vunpack.c.l.b16 %v260
      %v293 = vunpack.c.l.b16 %v261
      %v294 = vunpack.c.l.b16 %v262
      %v295 = vunpack.c.l.b16 %v263
      %v296 = vunpack.c.l.b16 %v264
      %v297 = vunpack.c.l.b16 %v265
      %v298 = vunpack.c.l.b16 %v266
      %v299 = vunpack.c.l.b16 %v267
      %v300 = vunpack.c.l.b16 %v268
      %v301 = vunpack.c.l.b16 %v269
      %v302 = vunpack.c.l.b16 %v270
      %v303 = vunpack.c.l.b16 %v271
      %v304 = vunpack.c.l.b16 %v272
      %v305 = vunpack.c.l.b16 %v273
      %v306 = vunpack.c.l.b16 %v274
      %v307 = vunpack.c.l.b16 %v275
      %v308 = vpack.c.b16 %v293, %v292
      %v309 = vpack.c.b16 %v295, %v294
      %v310 = vpack.c.b16 %v297, %v296
      %v311 = vpack.c.b16 %v299, %v298
      %v312 = vpack.c.b16 %v301, %v300
      %v313 = vpack.c.b16 %v303, %v302
      %v314 = vpack.c.b16 %v305, %v304
      %v315 = vpack.c.b16 %v307, %v306
      %324 = vmatprep.subr.bf16.mxu0 0
      %325 = vmatpush1.bf16.msra.mxu0 %v315
      %326 = vmatprep.subr.bf16.mxu0 0
      %327 = vmatpush1.bf16.msra.mxu0 %v314
      %328 = vmatprep.subr.bf16.mxu0 0
      %329 = vmatpush1.bf16.msra.mxu0 %v313
      %330 = vmatprep.subr.bf16.mxu0 0
      %331 = vmatpush1.bf16.msra.mxu0 %v312
      %332 = vmatprep.subr.bf16.mxu0 0
      %333 = vmatpush1.bf16.msra.mxu0 %v311
      %334 = vmatprep.subr.bf16.mxu0 0
      %335 = vmatpush1.bf16.msra.mxu0 %v310
      %336 = vmatprep.subr.bf16.mxu0 0
      %337 = vmatpush1.bf16.msra.mxu0 %v309
      %338 = vmatprep.subr.bf16.mxu0 0
      %339 = vmatpush1.bf16.msra.mxu0 %v308
      %340 = vmatprep.subr.bf16.mxu0 0
      %341 = vmatpush2.bf16.msra.mxu0 0
      %342 = vmatprep.subr.bf16.mxu0 0
      %343 = vmatpush2.bf16.msra.mxu0 0
      %344 = vmatprep.subr.bf16.mxu0 0
      %345 = vmatpush2.bf16.msra.mxu0 0
      %346 = vmatprep.subr.bf16.mxu0 0
      %347 = vmatpush2.bf16.msra.mxu0 0
      %348 = vmatprep.subr.bf16.mxu0 0
      %349 = vmatpush2.bf16.msra.mxu0 0
      %350 = vmatprep.subr.bf16.mxu0 0
      %351 = vmatpush2.bf16.msra.mxu0 0
      %352 = vmatprep.subr.bf16.mxu0 0
      %353 = vmatpush2.bf16.msra.mxu0 0
      %354 = vmatprep.subr.bf16.mxu0 0
      %355 = vmatpush2.bf16.msra.mxu0 0
      %356 = vmatprep.mubr.bf16.mxu0 0
      %357 = vmatmul.mubr.bf16.gmra.mxu0 %v258
      %v358 = vpop.f32.mrf.mxu0
      %v359 = vadd.f32 0.0, %v358
      %v360 = vpop.f32.mrf.mxu0
      %v361 = vpop.f32.mrf.mxu0
      %v362 = vadd.f32 0.0, %v361
      %v363 = vpop.f32.mrf.mxu0
      %364 = vdwg.mxu0
      %v381 = vunpack.c.l.b16 %v242
      %v382 = vunpack.c.l.b16 %v243
      %v383 = vunpack.c.l.b16 %v244
      %v384 = vunpack.c.l.b16 %v245
      %v385 = vunpack.c.l.b16 %v246
      %v386 = vunpack.c.l.b16 %v247
      %v387 = vunpack.c.l.b16 %v248
      %v388 = vunpack.c.l.b16 %v249
      %v389 = vunpack.c.l.b16 %v250
      %v390 = vunpack.c.l.b16 %v251
      %v391 = vunpack.c.l.b16 %v252
      %v392 = vunpack.c.l.b16 %v253
      %v393 = vunpack.c.l.b16 %v254
      %v394 = vunpack.c.l.b16 %v255
      %v395 = vunpack.c.l.b16 %v256
      %v396 = vunpack.c.l.b16 %v257
      %v397 = vpack.c.b16 %v382, %v381
      %v398 = vpack.c.b16 %v384, %v383
      %v399 = vpack.c.b16 %v386, %v385
      %v400 = vpack.c.b16 %v388, %v387
      %v401 = vpack.c.b16 %v390, %v389
      %v402 = vpack.c.b16 %v392, %v391
      %v403 = vpack.c.b16 %v394, %v393
      %v404 = vpack.c.b16 %v396, %v395
      %413 = vmatprep.subr.bf16.mxu0 0
      %414 = vmatpush1.bf16.msra.mxu0 %v404
      %415 = vmatprep.subr.bf16.mxu0 0
      %416 = vmatpush1.bf16.msra.mxu0 %v403
      %417 = vmatprep.subr.bf16.mxu0 0
      %418 = vmatpush1.bf16.msra.mxu0 %v402
      %419 = vmatprep.subr.bf16.mxu0 0
      %420 = vmatpush1.bf16.msra.mxu0 %v401
      %421 = vmatprep.subr.bf16.mxu0 0
      %422 = vmatpush1.bf16.msra.mxu0 %v400
      %423 = vmatprep.subr.bf16.mxu0 0
      %424 = vmatpush1.bf16.msra.mxu0 %v399
      %425 = vmatprep.subr.bf16.mxu0 0
      %426 = vmatpush1.bf16.msra.mxu0 %v398
      %427 = vmatprep.subr.bf16.mxu0 0
      %428 = vmatpush1.bf16.msra.mxu0 %v397
      %429 = vmatprep.subr.bf16.mxu0 0
      %430 = vmatpush2.bf16.msra.mxu0 0
      %431 = vmatprep.subr.bf16.mxu0 0
      %432 = vmatpush2.bf16.msra.mxu0 0
      %433 = vmatprep.subr.bf16.mxu0 0
      %434 = vmatpush2.bf16.msra.mxu0 0
      %435 = vmatprep.subr.bf16.mxu0 0
      %436 = vmatpush2.bf16.msra.mxu0 0
      %437 = vmatprep.subr.bf16.mxu0 0
      %438 = vmatpush2.bf16.msra.mxu0 0
      %439 = vmatprep.subr.bf16.mxu0 0
      %440 = vmatpush2.bf16.msra.mxu0 0
      %441 = vmatprep.subr.bf16.mxu0 0
      %442 = vmatpush2.bf16.msra.mxu0 0
      %443 = vmatprep.subr.bf16.mxu0 0
      %444 = vmatpush2.bf16.msra.mxu0 0
      %445 = vmatprep.mubr.bf16.mxu0 0
      %446 = vmatmul.mubr.bf16.gmra.mxu0 %v241
      %v447 = vpop.f32.mrf.mxu0
      %v448 = vadd.f32 %v359, %v447
      %v449 = vpop.f32.mrf.mxu0
      %v450 = vpop.f32.mrf.mxu0
      %v451 = vadd.f32 %v362, %v450
      %v452 = vpop.f32.mrf.mxu0
      %453 = vdwg.mxu0
      %v454 = vpack.c.bf16 %v240, %v239
      %s455 = scalar_lea.vmem %s2, 128
      %v456 = vld [vmem:[%s455] sm:$0xf]
      %v457 = vld [vmem:[%s455 + $0x4] sm:$0xf]
      %v458 = vld [vmem:[%s455 + $0x8] sm:$0xf]
      %v459 = vld [vmem:[%s455 + $0xc] sm:$0xf]
      %v460 = vld [vmem:[%s455 + $0x10] sm:$0xf]
      %v461 = vld [vmem:[%s455 + $0x14] sm:$0xf]
      %v462 = vld [vmem:[%s455 + $0x18] sm:$0xf]
      %v463 = vld [vmem:[%s455 + $0x1c] sm:$0xf]
      %v464 = vld [vmem:[%s455 + $0x20] sm:$0xf]
      %v465 = vld [vmem:[%s455 + $0x24] sm:$0xf]
      %v466 = vld [vmem:[%s455 + $0x28] sm:$0xf]
      %v467 = vld [vmem:[%s455 + $0x2c] sm:$0xf]
      %v468 = vld [vmem:[%s455 + $0x30] sm:$0xf]
      %v469 = vld [vmem:[%s455 + $0x34] sm:$0xf]
      %v470 = vld [vmem:[%s455 + $0x38] sm:$0xf]
      %v471 = vld [vmem:[%s455 + $0x3c] sm:$0xf]
      %v488 = vunpack.c.l.b16 %v456
      %v489 = vunpack.c.l.b16 %v457
      %v490 = vunpack.c.l.b16 %v458
      %v491 = vunpack.c.l.b16 %v459
      %v492 = vunpack.c.l.b16 %v460
      %v493 = vunpack.c.l.b16 %v461
      %v494 = vunpack.c.l.b16 %v462
      %v495 = vunpack.c.l.b16 %v463
      %v496 = vunpack.c.l.b16 %v464
      %v497 = vunpack.c.l.b16 %v465
      %v498 = vunpack.c.l.b16 %v466
      %v499 = vunpack.c.l.b16 %v467
      %v500 = vunpack.c.l.b16 %v468
      %v501 = vunpack.c.l.b16 %v469
      %v502 = vunpack.c.l.b16 %v470
      %v503 = vunpack.c.l.b16 %v471
      %v504 = vpack.c.b16 %v489, %v488
      %v505 = vpack.c.b16 %v491, %v490
      %v506 = vpack.c.b16 %v493, %v492
      %v507 = vpack.c.b16 %v495, %v494
      %v508 = vpack.c.b16 %v497, %v496
      %v509 = vpack.c.b16 %v499, %v498
      %v510 = vpack.c.b16 %v501, %v500
      %v511 = vpack.c.b16 %v503, %v502
      %520 = vmatprep.subr.bf16.mxu0 0
      %521 = vmatpush1.bf16.msra.mxu0 %v511
      %522 = vmatprep.subr.bf16.mxu0 0
      %523 = vmatpush1.bf16.msra.mxu0 %v510
      %524 = vmatprep.subr.bf16.mxu0 0
      %525 = vmatpush1.bf16.msra.mxu0 %v509
      %526 = vmatprep.subr.bf16.mxu0 0
      %527 = vmatpush1.bf16.msra.mxu0 %v508
      %528 = vmatprep.subr.bf16.mxu0 0
      %529 = vmatpush1.bf16.msra.mxu0 %v507
      %530 = vmatprep.subr.bf16.mxu0 0
      %531 = vmatpush1.bf16.msra.mxu0 %v506
      %532 = vmatprep.subr.bf16.mxu0 0
      %533 = vmatpush1.bf16.msra.mxu0 %v505
      %534 = vmatprep.subr.bf16.mxu0 0
      %535 = vmatpush1.bf16.msra.mxu0 %v504
      %536 = vmatprep.subr.bf16.mxu0 0
      %537 = vmatpush2.bf16.msra.mxu0 0
      %538 = vmatprep.subr.bf16.mxu0 0
      %539 = vmatpush2.bf16.msra.mxu0 0
      %540 = vmatprep.subr.bf16.mxu0 0
      %541 = vmatpush2.bf16.msra.mxu0 0
      %542 = vmatprep.subr.bf16.mxu0 0
      %543 = vmatpush2.bf16.msra.mxu0 0
      %544 = vmatprep.subr.bf16.mxu0 0
      %545 = vmatpush2.bf16.msra.mxu0 0
      %546 = vmatprep.subr.bf16.mxu0 0
      %547 = vmatpush2.bf16.msra.mxu0 0
      %548 = vmatprep.subr.bf16.mxu0 0
      %549 = vmatpush2.bf16.msra.mxu0 0
      %550 = vmatprep.subr.bf16.mxu0 0
      %551 = vmatpush2.bf16.msra.mxu0 0
      %552 = vmatprep.mubr.bf16.mxu0 0
      %553 = vmatmul.mubr.bf16.gmra.mxu0 %v454
      %v554 = vpop.f32.mrf.mxu0
      %v555 = vadd.f32 0.0, %v554
      %v556 = vpop.f32.mrf.mxu0
      %v557 = vpop.f32.mrf.mxu0
      %v558 = vadd.f32 0.0, %v557
      %v559 = vpop.f32.mrf.mxu0
      %560 = vdwg.mxu0
      %v561 = vadd.f32 %v448, %v555
      %v562 = vadd.f32 %v451, %v558
      %563 = vst [vmem:[%s195] sm:$0xff] %v561
      %564 = vst [vmem:[%s195 + $0x8] sm:$0xff] %v562
      %v565 = vld [vmem:[%s4] sm:$0x3]
      %v566 = vadd.f32 %v561, %v562
      %v567 = vrot.slane %v566, 4
      %v568 = vadd.f32 %v566, %v567
      %v569 = vrot.slane %v568, 2
      %v570 = vadd.f32 %v568, %v569
      %v571 = vrot.slane %v570, 1
      %v572 = vadd.f32 %v570, %v571
      %v573 = vmul.f32 %v561, %v561
      %v574 = vmul.f32 %v562, %v562
      %v575 = vadd.f32 %v573, %v574
      %v576 = vrot.slane %v575, 4
      %v577 = vadd.f32 %v575, %v576
      %v578 = vrot.slane %v577, 2
      %v579 = vadd.f32 %v577, %v578
      %v580 = vrot.slane %v579, 1
      %v581 = vadd.f32 %v579, %v580
      %vm582 = vcmask 1040384
      %v583 = vsel %vm582, %v572, %v581
      %v584 = vadd.f32 %v565, %v583
      %585 = vst [vmem:[%s4] sm:$0x3] %v584
      %p586 = scmp.lt.s32.totalorder %s16, 1
      %s587 = scalar_select %p586, %s16, 1
      %s588 = smul.addr %s587, 2
      %s589 = smul.addr %s588, 8
      %s590 = scalar_lea.vmem %s3, %s589
      // Predicated region
      $region37: #{residual_block.4} parent=31 // pred_check
        %p591 = pneg %p102
      $region38: #{residual_block.4} parent=31 // pred_check_branch
        %593 = sbr.rel (%p591) target = $region40
      $region39: #{residual_block.4} parent=31 // pred_region
        _
      $region40: #{residual_block.4} parent=31 // pred_fallthru
        _
      // Predicated region
      $region41: #{residual_block.4} parent=31 // pred_check
        %p594 = pneg %p123
      $region42: #{residual_block.4} parent=31 // pred_check_branch
        %596 = sbr.rel (%p594) target = $region44
      $region43: #{residual_block.4} parent=31 // pred_region
        _
      $region44: #{residual_block.4} parent=31 // pred_fallthru
        _
      // Predicated region
      $region45: #{residual_block.4} parent=31 // pred_check
        %p597 = pneg %p123
      $region46: #{residual_block.4} parent=31 // pred_check_branch
        %599 = sbr.rel (%p597) target = $region48
      $region47: #{residual_block.4} parent=31 // pred_region
        _
      $region48: #{residual_block.4} parent=31 // pred_fallthru
        _
    $region32: #{residual_block.4} parent=5 // pred_fallthru
      _
    %p600 = scmp.le.s32.totalorder 2, %s11
    // Predicated region
    $region49: #{residual_block.4} parent=5 // pred_check
      %p601 = pneg %p600
    $region50: #{residual_block.4} parent=5 // pred_check_branch
      %603 = sbr.rel (%p601) target = $region52
    $region51: #{residual_block.4} parent=5 // pred_region
      %s604 = ssub.s32 %s11, 2
      // Predicated region
      $region53: #{residual_block.4} parent=51 // pred_check
        %p605 = pneg %p108
      $region54: #{residual_block.4} parent=51 // pred_check_branch
        %607 = sbr.rel (%p605) target = $region56
      $region55: #{residual_block.4} parent=51 // pred_region
        %p608 = scmp.lt.s32.totalorder %s17, 1
        %s609 = scalar_select %p608, %s17, 1
        %s610 = smul.addr %s609, 2
        %s611 = smul.addr %s610, 8
        %s612 = scalar_lea.vmem %s3, %s611
      $region56: #{residual_block.4} parent=51 // pred_fallthru
        _
    $region52: #{residual_block.4} parent=5 // pred_fallthru
      _
  $region6: #{residual_block.4} parent=0 // loop_footer
    %s15 = sadd.s32 1, %s11
  $region7: #{residual_block.4} parent=0 // loop_footer_branch
    %10 = sbr.rel target = $region3
  $region8: #{residual_block.4} parent=0 // loop_exit
    _

</llo_original>
